<compile_context>
chip_gen: v5e
topology: v5e:2x2
jax: 0.10.0
libtpu: 0.0.40
codegen_flags: <defaults>
</compile_context>

<pallas_src>
import functools
import math

import jax
import jax.numpy as jnp
from jax.experimental import pallas as pl
from jax.experimental.pallas import tpu as pltpu

_BN_EPS = 1e-5


# --------------------------------- fused kernel ---------------------------------

def _psnet_fused_kernel(x_ref, w1_ref, b1_ref, g1_ref, bt1_ref,
                        w2_ref, b2_ref, g2_ref, bt2_ref,
                        w3_ref, b3_ref, g3_ref, bt3_ref,
                        wd_ref, bd_ref, o_ref,
                        p1_ref, p2_ref, p3_ref,
                        *, B, T, eps, mm_dtype):
    """Whole PSNet forward in one kernel.

    x_ref  : (B, T, C_in)        input (PyTorch pre-permute layout, channels on lanes)
    w*_ref : (K*C_in, C_out)     conv weights, im2col layout
    b*/g*/bt*_ref : (1, C_out)   conv bias / BN gamma / BN beta (lane-dense rows)
    wd_ref : (T, E)              decoder weight with AvgPool1d(E) folded in
    bd_ref : (1,)                decoder bias (SMEM scalar)
    o_ref  : (B, 1)              decoded output
    p*_ref : (B, T+K-1, C_in)    VMEM scratch holding the reflection-padded activations
    """

    def reflect_pad_into(dst_ref, src, pad_l, pad_r):
        # PyTorch ReflectionPad1d((pad_l, pad_r)) along the temporal (sublane) axis.
        dst_ref[:, pl.ds(pad_l, T), :] = src                      # interior
        for i in range(pad_l):                                    # left edge (<=3 rows)
            dst_ref[:, pl.ds(i, 1), :] = src[:, pad_l - i:pad_l - i + 1, :]
        for j in range(pad_r):                                    # right edge (<=4 rows)
            dst_ref[:, pl.ds(pad_l + T + j, 1), :] = src[:, T - 2 - j:T - 1 - j, :]

    def conv_bn_relu(p_ref, w_ref, b_ref, g_ref, bt_ref):
        # p_ref: (B, T+K-1, C_in) padded activation, w_ref: (K*C_in, C_out).
        p = p_ref[...]
        c_in = p.shape[-1]
        K = w_ref.shape[0] // c_in
        # im2col -> one big-contraction, lane-dense MXU matmul (instead of K taps/batch).
        a = jnp.concatenate([p[:, k:k + T, :] for k in range(K)], axis=-1)
        a = a.reshape(B * T, K * c_in)
        z = jnp.dot(a.astype(mm_dtype), w_ref[...].astype(mm_dtype),
                    preferred_element_type=jnp.float32)           # (B*T, C_out)
        z = z + b_ref[...]                                        # conv bias
        # BatchNorm1d with batch statistics (track_running_stats=False), biased variance:
        # one sublane reduce over the B*T rows for mean, one for the centered variance.
        n_inv = 1.0 / float(B * T)
        mean = jnp.sum(z, axis=0, keepdims=True) * n_inv          # (1, C_out)
        cz = z - mean
        var = jnp.sum(cz * cz, axis=0, keepdims=True) * n_inv     # (1, C_out)
        scale = g_ref[...] * jax.lax.rsqrt(var + eps)             # EUP rsqrt
        return jnp.maximum(cz * scale + bt_ref[...], 0.0)         # ReLU, (B*T, C_out)

    x = x_ref[...].astype(jnp.float32)

    # conv_block_1: ReflectionPad1d((3, 4)) + Conv1d(C_in -> 128, k=8) + BN + ReLU
    reflect_pad_into(p1_ref, x, 3, 4)
    y1 = conv_bn_relu(p1_ref, w1_ref, b1_ref, g1_ref, bt1_ref)    # (B*T, 128)

    # conv_block_2: ReflectionPad1d((2, 2)) + Conv1d(128 -> 256, k=5) + BN + ReLU
    reflect_pad_into(p2_ref, y1.reshape(B, T, y1.shape[-1]), 2, 2)
    y2 = conv_bn_relu(p2_ref, w2_ref, b2_ref, g2_ref, bt2_ref)    # (B*T, 256)

    # conv_block_3: ReflectionPad1d((1, 1)) + Conv1d(256 -> E, k=3) + BN + ReLU
    reflect_pad_into(p3_ref, y2.reshape(B, T, y2.shape[-1]), 1, 1)
    y3 = conv_bn_relu(p3_ref, w3_ref, b3_ref, g3_ref, bt3_ref)    # (B*T, E)

    # Decoder: AvgPool1d(E) + view + Linear(E*(T//E) -> 1), folded into wd_ref (T, E).
    e = y3.shape[-1]
    prod = y3.reshape(B, T, e) * wd_ref[...][None, :, :]
    s = jnp.sum(prod, axis=2)                                     # (B, T) lane reduce
    out = jnp.sum(s, axis=1, keepdims=True) + bd_ref[0]           # (B, 1) + SMEM scalar
    o_ref[...] = out.astype(o_ref.dtype)


# ----------------------------- wrapper / preprocessing -----------------------------

def prepare_psnet_params(params, temporal_len):
    """One-time parameter preprocessing (hoisted out of the per-call path).

    Converts PyTorch-layout params into the kernel layout:
      conv w (O, C, K) -> (K*C, O) im2col weight, vectors -> (1, C) rows,
      decoder (1, E*(T//E)) weight -> pool-folded lane-dense (T, E) map.
    """
    (w1, b1, g1, bt1, w2, b2, g2, bt2, w3, b3, g3, bt3, wd, bd) = params

    def wflat(w):
        o, c, k = w.shape
        return jnp.transpose(w, (2, 1, 0)).reshape(k * c, o)      # [k*C + c, o] = w[o, c, k]

    def row(v):
        return v.reshape(1, -1)

    T = temporal_len
    E = w3.shape[0]                                               # embed_dim
    Tp = T // E
    assert Tp >= 1, "temporal_len must be >= embed_dim for the decoder Linear"
    assert wd.shape == (1, E * Tp), "PSNet decoder uses decode_dim=1"
    # out[b] = sum_{t,c} y3[b, t, c] * wd2[t, c] + bd  (AvgPool1d folded in).
    wd_eff = jnp.repeat(wd.reshape(E, Tp), E, axis=1) / float(E)  # (E, Tp*E)
    wd2 = jnp.zeros((E, T), wd.dtype).at[:, :Tp * E].set(wd_eff).T  # (T, E)

    return (wflat(w1), row(b1), row(g1), row(bt1),
            wflat(w2), row(b2), row(g2), row(bt2),
            wflat(w3), row(b3), row(g3), row(bt3),
            wd2, bd.reshape(1))


def psnet_forward(x, prepped, *, eps=_BN_EPS, mm_dtype=jnp.float32):
    """PSNet forward. x: (B, T, C) float32 (layout before PyTorch's .permute(0, 2, 1))."""
    (w1f, b1, g1, bt1, w2f, b2, g2, bt2, w3f, b3, g3, bt3, wd2, bd) = prepped
    B, T, C_in = x.shape
    C1 = w1f.shape[1]
    C2 = w2f.shape[1]
    assert T >= 5, "ReflectionPad1d((3, 4)) requires temporal_len >= 5"

    kern = functools.partial(_psnet_fused_kernel, B=B, T=T, eps=eps, mm_dtype=mm_dtype)

    vmem_spec = pl.BlockSpec(memory_space=pltpu.MemorySpace.VMEM)
    smem_spec = pl.BlockSpec(memory_space=pltpu.MemorySpace.SMEM)

    scratch_shapes = [
        pltpu.VMEM((B, T + 7, C_in), jnp.float32),   # padded input   (K=8, pad (3,4))
        pltpu.VMEM((B, T + 4, C1), jnp.float32),     # padded y1      (K=5, pad (2,2))
        pltpu.VMEM((B, T + 2, C2), jnp.float32),     # padded y2      (K=3, pad (1,1))
    ]

    # Explicit VMEM limit: >= v5e's 16 MiB default scoped VMEM, <= v7x's 64 MiB physical.
    param_bytes = 4 * (int(x.size) + sum(int(a.size) for a in prepped))
    scratch_bytes = 4 * (B * (T + 7) * C_in + B * (T + 4) * C1 + B * (T + 2) * C2)
    work_bytes = 4 * B * T * (8 * C_in + 5 * C1 + 3 * C2 + C1 + C2)   # im2col + activations
    vmem_limit = int(min(max(4 * (param_bytes + scratch_bytes + work_bytes),
                             16 * 2 ** 20), 64 * 2 ** 20))

    return pl.pallas_call(
        kern,
        out_shape=jax.ShapeDtypeStruct((B, 1), x.dtype),
        in_specs=[vmem_spec] * 14 + [smem_spec],
        out_specs=vmem_spec,
        scratch_shapes=scratch_shapes,
        compiler_params=pltpu.CompilerParams(vmem_limit_bytes=vmem_limit),
    )(x, w1f, b1, g1, bt1, w2f, b2, g2, bt2, w3f, b3, g3, bt3, wd2, bd)


# ---------------- plain-JAX reference (mirrors the PyTorch module) ----------------

def _ref_block(y, w, b, gamma, beta, pad, eps=_BN_EPS):
    yp = jnp.pad(y, ((0, 0), (0, 0), pad), mode="reflect")
    z = jax.lax.conv_general_dilated(
        yp, w, window_strides=(1,), padding="VALID",
        dimension_numbers=("NCH", "OIH", "NCH"))
    z = z + b[None, :, None]
    mean = jnp.mean(z, axis=(0, 2), keepdims=True)
    var = jnp.var(z, axis=(0, 2), keepdims=True)
    z = (z - mean) * jax.lax.rsqrt(var + eps) * gamma[None, :, None] + beta[None, :, None]
    return jnp.maximum(z, 0.0)


def psnet_reference(x, params):
    (w1, b1, g1, bt1, w2, b2, g2, bt2, w3, b3, g3, bt3, wd, bd) = params
    y = jnp.transpose(x, (0, 2, 1))
    y = _ref_block(y, w1, b1, g1, bt1, (3, 4))
    y = _ref_block(y, w2, b2, g2, bt2, (2, 2))
    y = _ref_block(y, w3, b3, g3, bt3, (1, 1))
    B, C, T = y.shape
    Tp = T // C
    pooled = y[:, :, :Tp * C].reshape(B, C, Tp, C).mean(axis=3)   # AvgPool1d(embed)
    return pooled.reshape(B, -1) @ wd.T + bd                      # decoder: view + Linear


# ------------------------------------- demo -------------------------------------

if __name__ == "__main__":
    # Small shapes consistent with PSNet's forward (internal widths 128/256 are hardcoded).
    batch = 2
    num_channels = 4
    temporal_len = 32
    embed_dim = 8
    decode_dim = 1

    key = jax.random.PRNGKey(0)
    ks = jax.random.split(key, 16)

    def uconv(k, shape):
        bound = 1.0 / ((shape[1] * shape[2]) ** 0.5)
        return jax.random.uniform(k, shape, minval=-bound, maxval=bound, dtype=jnp.float32)

    def uvec(k, n, lo, hi):
        return jax.random.uniform(k, (n,), minval=lo, maxval=hi, dtype=jnp.float32)

    w1 = uconv(ks[0], (128, num_channels, 8))
    b1 = uvec(ks[1], 128, -0.1, 0.1)
    g1 = uvec(ks[2], 128, 0.5, 1.5)
    bt1 = uvec(ks[3], 128, -0.5, 0.5)

    w2 = uconv(ks[4], (256, 128, 5))
    b2 = uvec(ks[5], 256, -0.1, 0.1)
    g2 = uvec(ks[6], 256, 0.5, 1.5)
    bt2 = uvec(ks[7], 256, -0.5, 0.5)

    w3 = uconv(ks[8], (embed_dim, 256, 3))
    b3 = uvec(ks[9], embed_dim, -0.1, 0.1)
    g3 = uvec(ks[10], embed_dim, 0.5, 1.5)
    bt3 = uvec(ks[11], embed_dim, -0.5, 0.5)

    feat = embed_dim * (temporal_len // embed_dim)
    bound_d = 1.0 / (feat ** 0.5)
    wd = jax.random.uniform(ks[12], (decode_dim, feat), minval=-bound_d,
                            maxval=bound_d, dtype=jnp.float32)
    bd = jax.random.uniform(ks[13], (decode_dim,), minval=-bound_d,
                            maxval=bound_d, dtype=jnp.float32)

    x = jax.random.normal(ks[14], (batch, temporal_len, num_channels), dtype=jnp.float32)

    params = (w1, b1, g1, bt1, w2, b2, g2, bt2, w3, b3, g3, bt3, wd, bd)

    # One-time parameter preprocessing (layout conversion + pool-folded decoder weight).
    prepped = prepare_psnet_params(params, temporal_len)

    out = jax.jit(psnet_forward)(x, prepped)
    out = jax.block_until_ready(out)

    ref = psnet_reference(x, params)
    assert out.shape == (batch, decode_dim)
    assert jnp.allclose(out, ref, atol=1e-3, rtol=1e-3), (out, ref)

    print("KERNEL_OK")
</pallas_src>

<mosaic_0001>
module attributes {stable_mosaic.version = 11 : i64} {
  func.func @_psnet_fused_kernel(%arg0: memref<2x32x4xf32, #tpu.memory_space<vmem>>, %arg1: memref<32x128xf32, #tpu.memory_space<vmem>>, %arg2: memref<1x128xf32, #tpu.memory_space<vmem>>, %arg3: memref<1x128xf32, #tpu.memory_space<vmem>>, %arg4: memref<1x128xf32, #tpu.memory_space<vmem>>, %arg5: memref<640x256xf32, #tpu.memory_space<vmem>>, %arg6: memref<1x256xf32, #tpu.memory_space<vmem>>, %arg7: memref<1x256xf32, #tpu.memory_space<vmem>>, %arg8: memref<1x256xf32, #tpu.memory_space<vmem>>, %arg9: memref<768x8xf32, #tpu.memory_space<vmem>>, %arg10: memref<1x8xf32, #tpu.memory_space<vmem>>, %arg11: memref<1x8xf32, #tpu.memory_space<vmem>>, %arg12: memref<1x8xf32, #tpu.memory_space<vmem>>, %arg13: memref<32x8xf32, #tpu.memory_space<vmem>>, %arg14: memref<1xf32, #tpu.memory_space<smem>>, %arg15: memref<2x1xf32, #tpu.memory_space<vmem>>, %arg16: memref<2x39x4xf32, #tpu.memory_space<vmem>>, %arg17: memref<2x36x128xf32, #tpu.memory_space<vmem>>, %arg18: memref<2x34x256xf32, #tpu.memory_space<vmem>>) attributes {dimension_semantics = [], scalar_prefetch = 0 : i64, scratch_operands = 3 : i64, tpu.core_type = #tpu.core_type<tc>} {
    %c0 = arith.constant 0 : index
    %c0_0 = arith.constant 0 : index
    %c0_1 = arith.constant 0 : index
    %0 = vector.load %arg0[%c0, %c0_0, %c0_1] : memref<2x32x4xf32, #tpu.memory_space<vmem>>, vector<2x32x4xf32>
    %c0_2 = arith.constant 0 : index
    %c3 = arith.constant 3 : index
    %c0_3 = arith.constant 0 : index
    %1 = vector.load %arg16[%c0_2, %c3, %c0_3] : memref<2x39x4xf32, #tpu.memory_space<vmem>>, vector<2x32x4xf32>
    tpu.vector_store %arg16[%c0_2, %c3, %c0_3], %0 {strides = array<i32>} : memref<2x39x4xf32, #tpu.memory_space<vmem>>, vector<2x32x4xf32>,
    %2 = vector.extract_strided_slice %0 {offsets = [0, 3, 0], sizes = [2, 1, 4], strides = [1, 1, 1]} : vector<2x32x4xf32> to vector<2x1x4xf32>
    %c0_4 = arith.constant 0 : index
    %c0_5 = arith.constant 0 : index
    %c0_6 = arith.constant 0 : index
    %3 = vector.load %arg16[%c0_4, %c0_5, %c0_6] : memref<2x39x4xf32, #tpu.memory_space<vmem>>, vector<2x1x4xf32>
    tpu.vector_store %arg16[%c0_4, %c0_5, %c0_6], %2 {strides = array<i32>} : memref<2x39x4xf32, #tpu.memory_space<vmem>>, vector<2x1x4xf32>,
    %4 = vector.extract_strided_slice %0 {offsets = [0, 2, 0], sizes = [2, 1, 4], strides = [1, 1, 1]} : vector<2x32x4xf32> to vector<2x1x4xf32>
    %c0_7 = arith.constant 0 : index
    %c1 = arith.constant 1 : index
    %c0_8 = arith.constant 0 : index
    %5 = vector.load %arg16[%c0_7, %c1, %c0_8] : memref<2x39x4xf32, #tpu.memory_space<vmem>>, vector<2x1x4xf32>
    tpu.vector_store %arg16[%c0_7, %c1, %c0_8], %4 {strides = array<i32>} : memref<2x39x4xf32, #tpu.memory_space<vmem>>, vector<2x1x4xf32>,
    %6 = vector.extract_strided_slice %0 {offsets = [0, 1, 0], sizes = [2, 1, 4], strides = [1, 1, 1]} : vector<2x32x4xf32> to vector<2x1x4xf32>
    %c0_9 = arith.constant 0 : index
    %c2 = arith.constant 2 : index
    %c0_10 = arith.constant 0 : index
    %7 = vector.load %arg16[%c0_9, %c2, %c0_10] : memref<2x39x4xf32, #tpu.memory_space<vmem>>, vector<2x1x4xf32>
    tpu.vector_store %arg16[%c0_9, %c2, %c0_10], %6 {strides = array<i32>} : memref<2x39x4xf32, #tpu.memory_space<vmem>>, vector<2x1x4xf32>,
    %8 = vector.extract_strided_slice %0 {offsets = [0, 30, 0], sizes = [2, 1, 4], strides = [1, 1, 1]} : vector<2x32x4xf32> to vector<2x1x4xf32>
    %c0_11 = arith.constant 0 : index
    %c35 = arith.constant 35 : index
    %c0_12 = arith.constant 0 : index
    %9 = vector.load %arg16[%c0_11, %c35, %c0_12] : memref<2x39x4xf32, #tpu.memory_space<vmem>>, vector<2x1x4xf32>
    tpu.vector_store %arg16[%c0_11, %c35, %c0_12], %8 {strides = array<i32>} : memref<2x39x4xf32, #tpu.memory_space<vmem>>, vector<2x1x4xf32>,
    %10 = vector.extract_strided_slice %0 {offsets = [0, 29, 0], sizes = [2, 1, 4], strides = [1, 1, 1]} : vector<2x32x4xf32> to vector<2x1x4xf32>
    %c0_13 = arith.constant 0 : index
    %c36 = arith.constant 36 : index
    %c0_14 = arith.constant 0 : index
    %11 = vector.load %arg16[%c0_13, %c36, %c0_14] : memref<2x39x4xf32, #tpu.memory_space<vmem>>, vector<2x1x4xf32>
    tpu.vector_store %arg16[%c0_13, %c36, %c0_14], %10 {strides = array<i32>} : memref<2x39x4xf32, #tpu.memory_space<vmem>>, vector<2x1x4xf32>,
    %12 = vector.extract_strided_slice %0 {offsets = [0, 28, 0], sizes = [2, 1, 4], strides = [1, 1, 1]} : vector<2x32x4xf32> to vector<2x1x4xf32>
    %c0_15 = arith.constant 0 : index
    %c37 = arith.constant 37 : index
    %c0_16 = arith.constant 0 : index
    %13 = vector.load %arg16[%c0_15, %c37, %c0_16] : memref<2x39x4xf32, #tpu.memory_space<vmem>>, vector<2x1x4xf32>
    tpu.vector_store %arg16[%c0_15, %c37, %c0_16], %12 {strides = array<i32>} : memref<2x39x4xf32, #tpu.memory_space<vmem>>, vector<2x1x4xf32>,
    %14 = vector.extract_strided_slice %0 {offsets = [0, 27, 0], sizes = [2, 1, 4], strides = [1, 1, 1]} : vector<2x32x4xf32> to vector<2x1x4xf32>
    %c0_17 = arith.constant 0 : index
    %c38 = arith.constant 38 : index
    %c0_18 = arith.constant 0 : index
    %15 = vector.load %arg16[%c0_17, %c38, %c0_18] : memref<2x39x4xf32, #tpu.memory_space<vmem>>, vector<2x1x4xf32>
    tpu.vector_store %arg16[%c0_17, %c38, %c0_18], %14 {strides = array<i32>} : memref<2x39x4xf32, #tpu.memory_space<vmem>>, vector<2x1x4xf32>,
    %c0_19 = arith.constant 0 : index
    %c0_20 = arith.constant 0 : index
    %c0_21 = arith.constant 0 : index
    %16 = vector.load %arg16[%c0_19, %c0_20, %c0_21] : memref<2x39x4xf32, #tpu.memory_space<vmem>>, vector<2x39x4xf32>
    %17 = vector.extract_strided_slice %16 {offsets = [0, 0, 0], sizes = [2, 32, 4], strides = [1, 1, 1]} : vector<2x39x4xf32> to vector<2x32x4xf32>
    %18 = vector.extract_strided_slice %16 {offsets = [0, 1, 0], sizes = [2, 32, 4], strides = [1, 1, 1]} : vector<2x39x4xf32> to vector<2x32x4xf32>
    %19 = vector.extract_strided_slice %16 {offsets = [0, 2, 0], sizes = [2, 32, 4], strides = [1, 1, 1]} : vector<2x39x4xf32> to vector<2x32x4xf32>
    %20 = vector.extract_strided_slice %16 {offsets = [0, 3, 0], sizes = [2, 32, 4], strides = [1, 1, 1]} : vector<2x39x4xf32> to vector<2x32x4xf32>
    %21 = vector.extract_strided_slice %16 {offsets = [0, 4, 0], sizes = [2, 32, 4], strides = [1, 1, 1]} : vector<2x39x4xf32> to vector<2x32x4xf32>
    %22 = vector.extract_strided_slice %16 {offsets = [0, 5, 0], sizes = [2, 32, 4], strides = [1, 1, 1]} : vector<2x39x4xf32> to vector<2x32x4xf32>
    %23 = vector.extract_strided_slice %16 {offsets = [0, 6, 0], sizes = [2, 32, 4], strides = [1, 1, 1]} : vector<2x39x4xf32> to vector<2x32x4xf32>
    %24 = vector.extract_strided_slice %16 {offsets = [0, 7, 0], sizes = [2, 32, 4], strides = [1, 1, 1]} : vector<2x39x4xf32> to vector<2x32x4xf32>
    %25 = tpu.concatenate %17, %18, %19, %20, %21, %22, %23, %24 in 2 : vector<2x32x4xf32>, vector<2x32x4xf32>, vector<2x32x4xf32>, vector<2x32x4xf32>, vector<2x32x4xf32>, vector<2x32x4xf32>, vector<2x32x4xf32>, vector<2x32x4xf32> -> vector<2x32x32xf32>
    %26 = vector.shape_cast %25 : vector<2x32x32xf32> to vector<64x32xf32>
    %c0_22 = arith.constant 0 : index
    %c0_23 = arith.constant 0 : index
    %27 = vector.load %arg1[%c0_22, %c0_23] : memref<32x128xf32, #tpu.memory_space<vmem>>, vector<32x128xf32>
    %cst = arith.constant dense<0.000000e+00> : vector<64x128xf32>
    %28 = tpu.matmul %26, %27, %cst {dimension_numbers = #tpu.dot_dimension_numbers<[1], [0], [0], [1], [0, 0, 1, 1], [], []>} : vector<64x32xf32>, vector<32x128xf32>, vector<64x128xf32> -> vector<64x128xf32>
    %c0_24 = arith.constant 0 : index
    %c0_25 = arith.constant 0 : index
    %29 = vector.load %arg2[%c0_24, %c0_25] : memref<1x128xf32, #tpu.memory_space<vmem>>, vector<1x128xf32>
    %30 = vector.broadcast %29 : vector<1x128xf32> to vector<64x128xf32>
    %31 = arith.addf %28, %30 : vector<64x128xf32>
    %cst_26 = arith.constant dense<0.000000e+00> : vector<128xf32>
    %32 = vector.multi_reduction <add>, %31, %cst_26 [0] : vector<64x128xf32> to vector<128xf32>
    %33 = vector.shape_cast %32 : vector<128xf32> to vector<1x128xf32>
    %cst_27 = arith.constant 1.562500e-02 : f32
    %34 = vector.broadcast %cst_27 : f32 to vector<1x128xf32>
    %35 = arith.mulf %33, %34 : vector<1x128xf32>
    %36 = vector.broadcast %35 : vector<1x128xf32> to vector<64x128xf32>
    %37 = arith.subf %31, %36 : vector<64x128xf32>
    %38 = arith.mulf %37, %37 : vector<64x128xf32>
    %cst_28 = arith.constant dense<0.000000e+00> : vector<128xf32>
    %39 = vector.multi_reduction <add>, %38, %cst_28 [0] : vector<64x128xf32> to vector<128xf32>
    %40 = vector.shape_cast %39 : vector<128xf32> to vector<1x128xf32>
    %cst_29 = arith.constant 1.562500e-02 : f32
    %41 = vector.broadcast %cst_29 : f32 to vector<1x128xf32>
    %42 = arith.mulf %40, %41 : vector<1x128xf32>
    %c0_30 = arith.constant 0 : index
    %c0_31 = arith.constant 0 : index
    %43 = vector.load %arg3[%c0_30, %c0_31] : memref<1x128xf32, #tpu.memory_space<vmem>>, vector<1x128xf32>
    %cst_32 = arith.constant 9.99999974E-6 : f32
    %44 = vector.broadcast %cst_32 : f32 to vector<1x128xf32>
    %45 = arith.addf %42, %44 : vector<1x128xf32>
    %46 = math.rsqrt %45 : vector<1x128xf32>
    %47 = arith.mulf %43, %46 : vector<1x128xf32>
    %48 = vector.broadcast %47 : vector<1x128xf32> to vector<64x128xf32>
    %49 = arith.mulf %37, %48 : vector<64x128xf32>
    %c0_33 = arith.constant 0 : index
    %c0_34 = arith.constant 0 : index
    %50 = vector.load %arg4[%c0_33, %c0_34] : memref<1x128xf32, #tpu.memory_space<vmem>>, vector<1x128xf32>
    %51 = vector.broadcast %50 : vector<1x128xf32> to vector<64x128xf32>
    %52 = arith.addf %49, %51 : vector<64x128xf32>
    %cst_35 = arith.constant 0.000000e+00 : f32
    %53 = vector.broadcast %cst_35 : f32 to vector<64x128xf32>
    %54 = arith.maximumf %52, %53 : vector<64x128xf32>
    %55 = vector.shape_cast %54 : vector<64x128xf32> to vector<2x32x128xf32>
    %c0_36 = arith.constant 0 : index
    %c2_37 = arith.constant 2 : index
    %c0_38 = arith.constant 0 : index
    %56 = vector.load %arg17[%c0_36, %c2_37, %c0_38] : memref<2x36x128xf32, #tpu.memory_space<vmem>>, vector<2x32x128xf32>
    tpu.vector_store %arg17[%c0_36, %c2_37, %c0_38], %55 {strides = array<i32>} : memref<2x36x128xf32, #tpu.memory_space<vmem>>, vector<2x32x128xf32>,
    %57 = vector.extract_strided_slice %55 {offsets = [0, 2, 0], sizes = [2, 1, 128], strides = [1, 1, 1]} : vector<2x32x128xf32> to vector<2x1x128xf32>
    %c0_39 = arith.constant 0 : index
    %c0_40 = arith.constant 0 : index
    %c0_41 = arith.constant 0 : index
    %58 = vector.load %arg17[%c0_39, %c0_40, %c0_41] : memref<2x36x128xf32, #tpu.memory_space<vmem>>, vector<2x1x128xf32>
    tpu.vector_store %arg17[%c0_39, %c0_40, %c0_41], %57 {strides = array<i32>} : memref<2x36x128xf32, #tpu.memory_space<vmem>>, vector<2x1x128xf32>,
    %59 = vector.extract_strided_slice %55 {offsets = [0, 1, 0], sizes = [2, 1, 128], strides = [1, 1, 1]} : vector<2x32x128xf32> to vector<2x1x128xf32>
    %c0_42 = arith.constant 0 : index
    %c1_43 = arith.constant 1 : index
    %c0_44 = arith.constant 0 : index
    %60 = vector.load %arg17[%c0_42, %c1_43, %c0_44] : memref<2x36x128xf32, #tpu.memory_space<vmem>>, vector<2x1x128xf32>
    tpu.vector_store %arg17[%c0_42, %c1_43, %c0_44], %59 {strides = array<i32>} : memref<2x36x128xf32, #tpu.memory_space<vmem>>, vector<2x1x128xf32>,
    %61 = vector.extract_strided_slice %55 {offsets = [0, 30, 0], sizes = [2, 1, 128], strides = [1, 1, 1]} : vector<2x32x128xf32> to vector<2x1x128xf32>
    %c0_45 = arith.constant 0 : index
    %c34 = arith.constant 34 : index
    %c0_46 = arith.constant 0 : index
    %62 = vector.load %arg17[%c0_45, %c34, %c0_46] : memref<2x36x128xf32, #tpu.memory_space<vmem>>, vector<2x1x128xf32>
    tpu.vector_store %arg17[%c0_45, %c34, %c0_46], %61 {strides = array<i32>} : memref<2x36x128xf32, #tpu.memory_space<vmem>>, vector<2x1x128xf32>,
    %63 = vector.extract_strided_slice %55 {offsets = [0, 29, 0], sizes = [2, 1, 128], strides = [1, 1, 1]} : vector<2x32x128xf32> to vector<2x1x128xf32>
    %c0_47 = arith.constant 0 : index
    %c35_48 = arith.constant 35 : index
    %c0_49 = arith.constant 0 : index
    %64 = vector.load %arg17[%c0_47, %c35_48, %c0_49] : memref<2x36x128xf32, #tpu.memory_space<vmem>>, vector<2x1x128xf32>
    tpu.vector_store %arg17[%c0_47, %c35_48, %c0_49], %63 {strides = array<i32>} : memref<2x36x128xf32, #tpu.memory_space<vmem>>, vector<2x1x128xf32>,
    %c0_50 = arith.constant 0 : index
    %c0_51 = arith.constant 0 : index
    %c0_52 = arith.constant 0 : index
    %65 = vector.load %arg17[%c0_50, %c0_51, %c0_52] : memref<2x36x128xf32, #tpu.memory_space<vmem>>, vector<2x36x128xf32>
    %66 = vector.extract_strided_slice %65 {offsets = [0, 0, 0], sizes = [2, 32, 128], strides = [1, 1, 1]} : vector<2x36x128xf32> to vector<2x32x128xf32>
    %67 = vector.extract_strided_slice %65 {offsets = [0, 1, 0], sizes = [2, 32, 128], strides = [1, 1, 1]} : vector<2x36x128xf32> to vector<2x32x128xf32>
    %68 = vector.extract_strided_slice %65 {offsets = [0, 2, 0], sizes = [2, 32, 128], strides = [1, 1, 1]} : vector<2x36x128xf32> to vector<2x32x128xf32>
    %69 = vector.extract_strided_slice %65 {offsets = [0, 3, 0], sizes = [2, 32, 128], strides = [1, 1, 1]} : vector<2x36x128xf32> to vector<2x32x128xf32>
    %70 = vector.extract_strided_slice %65 {offsets = [0, 4, 0], sizes = [2, 32, 128], strides = [1, 1, 1]} : vector<2x36x128xf32> to vector<2x32x128xf32>
    %71 = tpu.concatenate %66, %67, %68, %69, %70 in 2 : vector<2x32x128xf32>, vector<2x32x128xf32>, vector<2x32x128xf32>, vector<2x32x128xf32>, vector<2x32x128xf32> -> vector<2x32x640xf32>
    %72 = vector.shape_cast %71 : vector<2x32x640xf32> to vector<64x640xf32>
    %c0_53 = arith.constant 0 : index
    %c0_54 = arith.constant 0 : index
    %73 = vector.load %arg5[%c0_53, %c0_54] : memref<640x256xf32, #tpu.memory_space<vmem>>, vector<640x256xf32>
    %cst_55 = arith.constant dense<0.000000e+00> : vector<64x256xf32>
    %74 = tpu.matmul %72, %73, %cst_55 {dimension_numbers = #tpu.dot_dimension_numbers<[1], [0], [0], [1], [0, 0, 1, 1], [], []>} : vector<64x640xf32>, vector<640x256xf32>, vector<64x256xf32> -> vector<64x256xf32>
    %c0_56 = arith.constant 0 : index
    %c0_57 = arith.constant 0 : index
    %75 = vector.load %arg6[%c0_56, %c0_57] : memref<1x256xf32, #tpu.memory_space<vmem>>, vector<1x256xf32>
    %76 = vector.broadcast %75 : vector<1x256xf32> to vector<64x256xf32>
    %77 = arith.addf %74, %76 : vector<64x256xf32>
    %cst_58 = arith.constant dense<0.000000e+00> : vector<256xf32>
    %78 = vector.multi_reduction <add>, %77, %cst_58 [0] : vector<64x256xf32> to vector<256xf32>
    %79 = vector.shape_cast %78 : vector<256xf32> to vector<1x256xf32>
    %cst_59 = arith.constant 1.562500e-02 : f32
    %80 = vector.broadcast %cst_59 : f32 to vector<1x256xf32>
    %81 = arith.mulf %79, %80 : vector<1x256xf32>
    %82 = vector.broadcast %81 : vector<1x256xf32> to vector<64x256xf32>
    %83 = arith.subf %77, %82 : vector<64x256xf32>
    %84 = arith.mulf %83, %83 : vector<64x256xf32>
    %cst_60 = arith.constant dense<0.000000e+00> : vector<256xf32>
    %85 = vector.multi_reduction <add>, %84, %cst_60 [0] : vector<64x256xf32> to vector<256xf32>
    %86 = vector.shape_cast %85 : vector<256xf32> to vector<1x256xf32>
    %cst_61 = arith.constant 1.562500e-02 : f32
    %87 = vector.broadcast %cst_61 : f32 to vector<1x256xf32>
    %88 = arith.mulf %86, %87 : vector<1x256xf32>
    %c0_62 = arith.constant 0 : index
    %c0_63 = arith.constant 0 : index
    %89 = vector.load %arg7[%c0_62, %c0_63] : memref<1x256xf32, #tpu.memory_space<vmem>>, vector<1x256xf32>
    %cst_64 = arith.constant 9.99999974E-6 : f32
    %90 = vector.broadcast %cst_64 : f32 to vector<1x256xf32>
    %91 = arith.addf %88, %90 : vector<1x256xf32>
    %92 = math.rsqrt %91 : vector<1x256xf32>
    %93 = arith.mulf %89, %92 : vector<1x256xf32>
    %94 = vector.broadcast %93 : vector<1x256xf32> to vector<64x256xf32>
    %95 = arith.mulf %83, %94 : vector<64x256xf32>
    %c0_65 = arith.constant 0 : index
    %c0_66 = arith.constant 0 : index
    %96 = vector.load %arg8[%c0_65, %c0_66] : memref<1x256xf32, #tpu.memory_space<vmem>>, vector<1x256xf32>
    %97 = vector.broadcast %96 : vector<1x256xf32> to vector<64x256xf32>
    %98 = arith.addf %95, %97 : vector<64x256xf32>
    %cst_67 = arith.constant 0.000000e+00 : f32
    %99 = vector.broadcast %cst_67 : f32 to vector<64x256xf32>
    %100 = arith.maximumf %98, %99 : vector<64x256xf32>
    %101 = vector.shape_cast %100 : vector<64x256xf32> to vector<2x32x256xf32>
    %c0_68 = arith.constant 0 : index
    %c1_69 = arith.constant 1 : index
    %c0_70 = arith.constant 0 : index
    %102 = vector.load %arg18[%c0_68, %c1_69, %c0_70] : memref<2x34x256xf32, #tpu.memory_space<vmem>>, vector<2x32x256xf32>
    tpu.vector_store %arg18[%c0_68, %c1_69, %c0_70], %101 {strides = array<i32>} : memref<2x34x256xf32, #tpu.memory_space<vmem>>, vector<2x32x256xf32>,
    %103 = vector.extract_strided_slice %101 {offsets = [0, 1, 0], sizes = [2, 1, 256], strides = [1, 1, 1]} : vector<2x32x256xf32> to vector<2x1x256xf32>
    %c0_71 = arith.constant 0 : index
    %c0_72 = arith.constant 0 : index
    %c0_73 = arith.constant 0 : index
    %104 = vector.load %arg18[%c0_71, %c0_72, %c0_73] : memref<2x34x256xf32, #tpu.memory_space<vmem>>, vector<2x1x256xf32>
    tpu.vector_store %arg18[%c0_71, %c0_72, %c0_73], %103 {strides = array<i32>} : memref<2x34x256xf32, #tpu.memory_space<vmem>>, vector<2x1x256xf32>,
    %105 = vector.extract_strided_slice %101 {offsets = [0, 30, 0], sizes = [2, 1, 256], strides = [1, 1, 1]} : vector<2x32x256xf32> to vector<2x1x256xf32>
    %c0_74 = arith.constant 0 : index
    %c33 = arith.constant 33 : index
    %c0_75 = arith.constant 0 : index
    %106 = vector.load %arg18[%c0_74, %c33, %c0_75] : memref<2x34x256xf32, #tpu.memory_space<vmem>>, vector<2x1x256xf32>
    tpu.vector_store %arg18[%c0_74, %c33, %c0_75], %105 {strides = array<i32>} : memref<2x34x256xf32, #tpu.memory_space<vmem>>, vector<2x1x256xf32>,
    %c0_76 = arith.constant 0 : index
    %c0_77 = arith.constant 0 : index
    %c0_78 = arith.constant 0 : index
    %107 = vector.load %arg18[%c0_76, %c0_77, %c0_78] : memref<2x34x256xf32, #tpu.memory_space<vmem>>, vector<2x34x256xf32>
    %108 = vector.extract_strided_slice %107 {offsets = [0, 0, 0], sizes = [2, 32, 256], strides = [1, 1, 1]} : vector<2x34x256xf32> to vector<2x32x256xf32>
    %109 = vector.extract_strided_slice %107 {offsets = [0, 1, 0], sizes = [2, 32, 256], strides = [1, 1, 1]} : vector<2x34x256xf32> to vector<2x32x256xf32>
    %110 = vector.extract_strided_slice %107 {offsets = [0, 2, 0], sizes = [2, 32, 256], strides = [1, 1, 1]} : vector<2x34x256xf32> to vector<2x32x256xf32>
    %111 = tpu.concatenate %108, %109, %110 in 2 : vector<2x32x256xf32>, vector<2x32x256xf32>, vector<2x32x256xf32> -> vector<2x32x768xf32>
    %112 = vector.shape_cast %111 : vector<2x32x768xf32> to vector<64x768xf32>
    %c0_79 = arith.constant 0 : index
    %c0_80 = arith.constant 0 : index
    %113 = vector.load %arg9[%c0_79, %c0_80] : memref<768x8xf32, #tpu.memory_space<vmem>>, vector<768x8xf32>
    %cst_81 = arith.constant dense<0.000000e+00> : vector<64x8xf32>
    %114 = tpu.matmul %112, %113, %cst_81 {dimension_numbers = #tpu.dot_dimension_numbers<[1], [0], [0], [1], [0, 0, 1, 1], [], []>} : vector<64x768xf32>, vector<768x8xf32>, vector<64x8xf32> -> vector<64x8xf32>
    %c0_82 = arith.constant 0 : index
    %c0_83 = arith.constant 0 : index
    %115 = vector.load %arg10[%c0_82, %c0_83] : memref<1x8xf32, #tpu.memory_space<vmem>>, vector<1x8xf32>
    %116 = vector.broadcast %115 : vector<1x8xf32> to vector<64x8xf32>
    %117 = arith.addf %114, %116 : vector<64x8xf32>
    %cst_84 = arith.constant dense<0.000000e+00> : vector<8xf32>
    %118 = vector.multi_reduction <add>, %117, %cst_84 [0] : vector<64x8xf32> to vector<8xf32>
    %119 = vector.shape_cast %118 : vector<8xf32> to vector<1x8xf32>
    %cst_85 = arith.constant 1.562500e-02 : f32
    %120 = vector.broadcast %cst_85 : f32 to vector<1x8xf32>
    %121 = arith.mulf %119, %120 : vector<1x8xf32>
    %122 = vector.broadcast %121 : vector<1x8xf32> to vector<64x8xf32>
    %123 = arith.subf %117, %122 : vector<64x8xf32>
    %124 = arith.mulf %123, %123 : vector<64x8xf32>
    %cst_86 = arith.constant dense<0.000000e+00> : vector<8xf32>
    %125 = vector.multi_reduction <add>, %124, %cst_86 [0] : vector<64x8xf32> to vector<8xf32>
    %126 = vector.shape_cast %125 : vector<8xf32> to vector<1x8xf32>
    %cst_87 = arith.constant 1.562500e-02 : f32
    %127 = vector.broadcast %cst_87 : f32 to vector<1x8xf32>
    %128 = arith.mulf %126, %127 : vector<1x8xf32>
    %c0_88 = arith.constant 0 : index
    %c0_89 = arith.constant 0 : index
    %129 = vector.load %arg11[%c0_88, %c0_89] : memref<1x8xf32, #tpu.memory_space<vmem>>, vector<1x8xf32>
    %cst_90 = arith.constant 9.99999974E-6 : f32
    %130 = vector.broadcast %cst_90 : f32 to vector<1x8xf32>
    %131 = arith.addf %128, %130 : vector<1x8xf32>
    %132 = math.rsqrt %131 : vector<1x8xf32>
    %133 = arith.mulf %129, %132 : vector<1x8xf32>
    %134 = vector.broadcast %133 : vector<1x8xf32> to vector<64x8xf32>
    %135 = arith.mulf %123, %134 : vector<64x8xf32>
    %c0_91 = arith.constant 0 : index
    %c0_92 = arith.constant 0 : index
    %136 = vector.load %arg12[%c0_91, %c0_92] : memref<1x8xf32, #tpu.memory_space<vmem>>, vector<1x8xf32>
    %137 = vector.broadcast %136 : vector<1x8xf32> to vector<64x8xf32>
    %138 = arith.addf %135, %137 : vector<64x8xf32>
    %cst_93 = arith.constant 0.000000e+00 : f32
    %139 = vector.broadcast %cst_93 : f32 to vector<64x8xf32>
    %140 = arith.maximumf %138, %139 : vector<64x8xf32>
    %141 = vector.shape_cast %140 : vector<64x8xf32> to vector<2x32x8xf32>
    %c0_94 = arith.constant 0 : index
    %c0_95 = arith.constant 0 : index
    %142 = vector.load %arg13[%c0_94, %c0_95] : memref<32x8xf32, #tpu.memory_space<vmem>>, vector<32x8xf32>
    %143 = vector.shape_cast %142 : vector<32x8xf32> to vector<1x32x8xf32>
    %144 = vector.broadcast %143 : vector<1x32x8xf32> to vector<2x32x8xf32>
    %145 = arith.mulf %141, %144 : vector<2x32x8xf32>
    %cst_96 = arith.constant dense<0.000000e+00> : vector<2x32xf32>
    %146 = vector.multi_reduction <add>, %145, %cst_96 [2] : vector<2x32x8xf32> to vector<2x32xf32>
    %cst_97 = arith.constant dense<0.000000e+00> : vector<2xf32>
    %147 = vector.multi_reduction <add>, %146, %cst_97 [1] : vector<2x32xf32> to vector<2xf32>
    %148 = vector.shape_cast %147 : vector<2xf32> to vector<2x1xf32>
    %c0_98 = arith.constant 0 : index
    %149 = memref.load %arg14[%c0_98] : memref<1xf32, #tpu.memory_space<smem>>
    %150 = vector.broadcast %149 : f32 to vector<2x1xf32>
    %151 = arith.addf %148, %150 : vector<2x1xf32>
    %c0_99 = arith.constant 0 : index
    %c0_100 = arith.constant 0 : index
    %152 = vector.load %arg15[%c0_99, %c0_100] : memref<2x1xf32, #tpu.memory_space<vmem>>, vector<2x1xf32>
    tpu.vector_store %arg15[%c0_99, %c0_100], %151 {strides = array<i32>} : memref<2x1xf32, #tpu.memory_space<vmem>>, vector<2x1xf32>,
    return
  }
}

</mosaic_0001>

<llo_original>
// kernel: psnet_forward.1
$region0: #{psnet_forward.1}
  #allocation0 [shape = 'u32[]', space=smem, size = 0x4, offset = 0x4, fixed_abs, tag = 'smem constant byte address 0x4 - core index']
  #allocation1 [shape = 'u32[72,128]{1,0:T(1,128)}', space=vmem, size = 0x9000, scoped, tag = 'internal scratch']
  #allocation2 [shape = 'f32[2,39,4]{2,1,0:T(8,128)}', space=vmem, size = 0xa000, scoped, tag = 'scratch operand']
  #allocation3 [shape = 'f32[2,36,128]{2,1,0:T(8,128)}', space=vmem, size = 0xa000, scoped, tag = 'scratch operand']
  #allocation4 [shape = 'f32[2,34,256]{2,1,0:T(8,128)}', space=vmem, size = 0x14000, scoped, tag = 'scratch operand']
  #allocation5 [shape = 'f32[1]{0:T(128)S(6)}', space=smem, size = 0x200, scoped, tag = 'scoped memory for psnet_forward.1']
  %s0 = inlined_call_operand.vmem [shape: f32[2,32,4], index: 0, kind: input, shape index: {}]
  %s1 = inlined_call_operand.vmem [shape: f32[32,128], index: 1, kind: input, shape index: {}]
  %s2 = inlined_call_operand.vmem [shape: f32[1,128], index: 2, kind: input, shape index: {}]
  %s3 = inlined_call_operand.vmem [shape: f32[1,128], index: 3, kind: input, shape index: {}]
  %s4 = inlined_call_operand.vmem [shape: f32[1,128], index: 4, kind: input, shape index: {}]
  %s5 = inlined_call_operand.hbm [shape: f32[640,256], index: 5, kind: input, shape index: {}]
  %s6 = inlined_call_operand.vmem [shape: f32[1,256], index: 6, kind: input, shape index: {}]
  %s7 = inlined_call_operand.vmem [shape: f32[1,256], index: 7, kind: input, shape index: {}]
  %s8 = inlined_call_operand.vmem [shape: f32[1,256], index: 8, kind: input, shape index: {}]
  %s9 = inlined_call_operand.vmem [shape: f32[768,8], index: 9, kind: input, shape index: {}]
  %s10 = inlined_call_operand.vmem [shape: f32[1,8], index: 10, kind: input, shape index: {}]
  %s11 = inlined_call_operand.vmem [shape: f32[1,8], index: 11, kind: input, shape index: {}]
  %s12 = inlined_call_operand.vmem [shape: f32[1,8], index: 12, kind: input, shape index: {}]
  %s13 = inlined_call_operand.vmem [shape: f32[32,8], index: 13, kind: input, shape index: {}]
  %s14 = inlined_call_operand.<no memory space> [shape: f32[1], index: 14, kind: input, shape index: {}]
  %s15 = inlined_call_operand.vmem [shape: f32[2,1], index: 15, kind: output, shape index: {}]
  %s16 = sld [smem:[#allocation0]]
  $region74: #{psnet_forward.1} parent=0
    _
  %s18 = ssub.s32 1, %s16
  %s19 = scalar_select 0, %s18, %s16
  %20 = sst [smem:[#allocation5]] %s14
  $region1: #{psnet_forward.1} parent=0
    #allocation6 [shape = 'u8[655360]{0}', space=vmem, size = 0xa0000, scoped, tag = 'input window, operand 5, single buffered']
    #allocation7 [shape = 's32[1]{0}', space=sflag, size = 0x4, scoped, tag = 'scoped memory for psnet_forward.1']
    %21 = vsyncpa [#allocation7], 0
    // Predicated region
    $region2: #{psnet_forward.1} parent=1 // pred_check
      _
    $region3: #{psnet_forward.1} parent=1 // pred_check_branch
      %23 = sbr.rel (0) target = $region5
    $region4: #{psnet_forward.1} parent=1 // pred_region
      _
    $region5: #{psnet_forward.1} parent=1 // pred_fallthru
      _
    // Predicated region
    $region6: #{psnet_forward.1} parent=1 // pred_check
      _
    $region7: #{psnet_forward.1} parent=1 // pred_check_branch
      %25 = sbr.rel (0) target = $region9
    $region8: #{psnet_forward.1} parent=1 // pred_region
      _
    $region9: #{psnet_forward.1} parent=1 // pred_fallthru
      _
    // Predicated region
    $region10: #{psnet_forward.1} parent=1 // pred_check
      _
    $region11: #{psnet_forward.1} parent=1 // pred_check_branch
      %27 = sbr.rel (0) target = $region13
    $region12: #{psnet_forward.1} parent=1 // pred_region
      _
    $region13: #{psnet_forward.1} parent=1 // pred_fallthru
      _
    // Predicated region
    $region14: #{psnet_forward.1} parent=1 // pred_check
      _
    $region15: #{psnet_forward.1} parent=1 // pred_check_branch
      %29 = sbr.rel (0) target = $region17
    $region16: #{psnet_forward.1} parent=1 // pred_region
      _
    $region17: #{psnet_forward.1} parent=1 // pred_fallthru
      _
    // Predicated region
    $region18: #{psnet_forward.1} parent=1 // pred_check
      _
    $region19: #{psnet_forward.1} parent=1 // pred_check_branch
      %31 = sbr.rel (0) target = $region21
    $region20: #{psnet_forward.1} parent=1 // pred_region
      _
    $region21: #{psnet_forward.1} parent=1 // pred_fallthru
      _
    // Predicated region
    $region22: #{psnet_forward.1} parent=1 // pred_check
      _
    $region23: #{psnet_forward.1} parent=1 // pred_check_branch
      %33 = sbr.rel (0) target = $region25
    $region24: #{psnet_forward.1} parent=1 // pred_region
      %35 = vsyncadd [#allocation7], 0
      %s36 = sshll.u32 %s5, 4
      %s37 = int_to_ptr.hbm [resolvable:$true] %s36
      %s38 = sshll.u32 [#allocation6], 4
      %s39 = int_to_ptr.vmem [resolvable:$true] %s38
      %44 = dma.hbm_to_vmem [thread:$0]  %s37, 20480, %s39, [#allocation7], 256, 256, 16
    $region25: #{psnet_forward.1} parent=1 // pred_fallthru
      _
    // Predicated region
    $region26: #{psnet_forward.1} parent=1 // pred_check
      _
    $region27: #{psnet_forward.1} parent=1 // pred_check_branch
      %46 = sbr.rel (0) target = $region29
    $region28: #{psnet_forward.1} parent=1 // pred_region
      _
    $region29: #{psnet_forward.1} parent=1 // pred_fallthru
      _
    // Predicated region
    $region30: #{psnet_forward.1} parent=1 // pred_check
      _
    $region31: #{psnet_forward.1} parent=1 // pred_check_branch
      %48 = sbr.rel (0) target = $region33
    $region32: #{psnet_forward.1} parent=1 // pred_region
      _
    $region33: #{psnet_forward.1} parent=1 // pred_fallthru
      _
    // Predicated region
    $region34: #{psnet_forward.1} parent=1 // pred_check
      _
    $region35: #{psnet_forward.1} parent=1 // pred_check_branch
      %50 = sbr.rel (0) target = $region37
    $region36: #{psnet_forward.1} parent=1 // pred_region
      _
    $region37: #{psnet_forward.1} parent=1 // pred_fallthru
      _
    // Predicated region
    $region38: #{psnet_forward.1} parent=1 // pred_check
      _
    $region39: #{psnet_forward.1} parent=1 // pred_check_branch
      %52 = sbr.rel (0) target = $region41
    $region40: #{psnet_forward.1} parent=1 // pred_region
      _
    $region41: #{psnet_forward.1} parent=1 // pred_fallthru
      _
    // Predicated region
    $region42: #{psnet_forward.1} parent=1 // pred_check
      _
    $region43: #{psnet_forward.1} parent=1 // pred_check_branch
      %54 = sbr.rel (0) target = $region45
    $region44: #{psnet_forward.1} parent=1 // pred_region
      _
    $region45: #{psnet_forward.1} parent=1 // pred_fallthru
      _
    // Predicated region
    $region46: #{psnet_forward.1} parent=1 // pred_check
      _
    $region47: #{psnet_forward.1} parent=1 // pred_check_branch
      %56 = sbr.rel (0) target = $region49
    $region48: #{psnet_forward.1} parent=1 // pred_region
      _
    $region49: #{psnet_forward.1} parent=1 // pred_fallthru
      _
    // Predicated region
    $region50: #{psnet_forward.1} parent=1 // pred_check
      _
    $region51: #{psnet_forward.1} parent=1 // pred_check_branch
      %58 = sbr.rel (0) target = $region53
    $region52: #{psnet_forward.1} parent=1 // pred_region
      _
    $region53: #{psnet_forward.1} parent=1 // pred_fallthru
      _
    // Predicated region
    $region54: #{psnet_forward.1} parent=1 // pred_check
      _
    $region55: #{psnet_forward.1} parent=1 // pred_check_branch
      %60 = sbr.rel (0) target = $region57
    $region56: #{psnet_forward.1} parent=1 // pred_region
      _
    $region57: #{psnet_forward.1} parent=1 // pred_fallthru
      _
    // Predicated region
    $region58: #{psnet_forward.1} parent=1 // pred_check
      _
    $region59: #{psnet_forward.1} parent=1 // pred_check_branch
      %62 = sbr.rel (0) target = $region61
    $region60: #{psnet_forward.1} parent=1 // pred_region
      _
    $region61: #{psnet_forward.1} parent=1 // pred_fallthru
      _
    // Predicated region
    $region62: #{psnet_forward.1} parent=1 // pred_check
      _
    $region63: #{psnet_forward.1} parent=1 // pred_check_branch
      %64 = sbr.rel (0) target = $region65
    $region64: #{psnet_forward.1} parent=1 // pred_region
      %66 = dma.done [#allocation7], 20480
    $region65: #{psnet_forward.1} parent=1 // pred_fallthru
      _
    %v67 = vld [vmem:[%s0] sm:$0xff]
    %v68 = vld [vmem:[%s0 + $0x8] sm:$0xff]
    %v69 = vld [vmem:[%s0 + $0x10] sm:$0xff]
    %v70 = vld [vmem:[%s0 + $0x18] sm:$0xff]
    %v71 = vld [vmem:[%s0 + $0x20] sm:$0xff]
    %v72 = vld [vmem:[%s0 + $0x28] sm:$0xff]
    %v73 = vld [vmem:[%s0 + $0x30] sm:$0xff]
    %v74 = vld [vmem:[%s0 + $0x38] sm:$0xff]
    %vm75 = vcmask 31744
    %76 = vst.msk [vmem:[#allocation2 + $0x3] sm:$0xff] %vm75, %v67
    %77 = vst.msk [vmem:[#allocation2 + $0xb] sm:$0xff] %vm75, %v68
    %78 = vst.msk [vmem:[#allocation2 + $0x13] sm:$0xff] %vm75, %v69
    %79 = vst.msk [vmem:[#allocation2 + $0x1b] sm:$0xff] %vm75, %v70
    %80 = vst.msk [vmem:[#allocation2 + $0x2b] sm:$0xff] %vm75, %v71
    %81 = vst.msk [vmem:[#allocation2 + $0x33] sm:$0xff] %vm75, %v72
    %82 = vst.msk [vmem:[#allocation2 + $0x3b] sm:$0xff] %vm75, %v73
    %83 = vst.msk [vmem:[#allocation2 + $0x43] sm:$0xff] %vm75, %v74
    %vm84 = vcmask 27651
    %85 = vst.msk [vmem:[#allocation2 - $0x3] sm:$0x8] %vm84, %v67
    %86 = vst.msk [vmem:[#allocation2 + $0x25] sm:$0x8] %vm84, %v71
    %vm87 = vcmask 26626
    %88 = vst.msk [vmem:[#allocation2 - $0x1] sm:$0x4] %vm87, %v67
    %89 = vst.msk [vmem:[#allocation2 + $0x27] sm:$0x4] %vm87, %v71
    %vm90 = vcmask 25601
    %91 = vst.msk [vmem:[#allocation2 + $0x1] sm:$0x2] %vm90, %v67
    %92 = vst.msk [vmem:[#allocation2 + $0x29] sm:$0x2] %vm90, %v71
    %vm93 = vcmask 30726
    %94 = vst.msk [vmem:[#allocation2 + $0x1d] sm:$0x40] %vm93, %v70
    %95 = vst.msk [vmem:[#allocation2 + $0x45] sm:$0x40] %vm93, %v74
    %vm96 = vcmask 29701
    %97 = vst.msk [vmem:[#allocation2 + $0x1f] sm:$0x20] %vm96, %v70
    %98 = vst.msk [vmem:[#allocation2 + $0x47] sm:$0x20] %vm96, %v74
    %vm99 = vcmask 28676
    %100 = vst.msk [vmem:[#allocation2 + $0x21] sm:$0x10] %vm99, %v70
    %101 = vst.msk [vmem:[#allocation2 + $0x49] sm:$0x10] %vm99, %v74
    %102 = vst.msk [vmem:[#allocation2 + $0x23] sm:$0x8] %vm84, %v70
    %103 = vst.msk [vmem:[#allocation2 + $0x4b] sm:$0x8] %vm84, %v74
    %v104 = vld [vmem:[#allocation2] sm:$0xff]
    %v105 = vld [vmem:[#allocation2 + $0x8] sm:$0xff]
    %v106 = vld [vmem:[#allocation2 + $0x10] sm:$0xff]
    %v107 = vld [vmem:[#allocation2 + $0x18] sm:$0xff]
    %v108 = vld [vmem:[#allocation2 + $0x20] sm:$0x7f]
    %v109 = vld [vmem:[#allocation2 + $0x28] sm:$0xff]
    %v110 = vld [vmem:[#allocation2 + $0x30] sm:$0xff]
    %v111 = vld [vmem:[#allocation2 + $0x38] sm:$0xff]
    %v112 = vld [vmem:[#allocation2 + $0x40] sm:$0xff]
    %v113 = vld [vmem:[#allocation2 + $0x48] sm:$0x7f]
    %vm124 = vcmask 1046528
    %v125 = vrot.slane %v104, 1
    %v126 = vrot.slane %v105, 1
    %v127 = vsel %vm124, %v125, %v126
    %v128 = vrot.slane %v106, 1
    %v129 = vsel %vm124, %v126, %v128
    %v130 = vrot.slane %v107, 1
    %v131 = vsel %vm124, %v128, %v130
    %v132 = vrot.slane %v108, 1
    %v133 = vsel %vm124, %v130, %v132
    %v134 = vrot.slane %v109, 1
    %v135 = vrot.slane %v110, 1
    %v136 = vsel %vm124, %v134, %v135
    %v137 = vrot.slane %v111, 1
    %v138 = vsel %vm124, %v135, %v137
    %v139 = vrot.slane %v112, 1
    %v140 = vsel %vm124, %v137, %v139
    %v141 = vrot.slane %v113, 1
    %v142 = vsel %vm124, %v139, %v141
    %143 = vrot.lane.b32.xlu0 %v127, 4
    %v144 = vpop.permute.xlu0 %143
    %145 = vrot.lane.b32.xlu0 %v129, 4
    %v146 = vpop.permute.xlu0 %145
    %147 = vrot.lane.b32.xlu0 %v131, 4
    %v148 = vpop.permute.xlu0 %147
    %149 = vrot.lane.b32.xlu0 %v133, 4
    %v150 = vpop.permute.xlu0 %149
    %151 = vrot.lane.b32.xlu0 %v136, 4
    %v152 = vpop.permute.xlu0 %151
    %153 = vrot.lane.b32.xlu0 %v138, 4
    %v154 = vpop.permute.xlu0 %153
    %155 = vrot.lane.b32.xlu0 %v140, 4
    %v156 = vpop.permute.xlu0 %155
    %157 = vrot.lane.b32.xlu0 %v142, 4
    %v158 = vpop.permute.xlu0 %157
    %vm167 = vcmask 1045504
    %v168 = vrot.slane %v104, 2
    %v169 = vrot.slane %v105, 2
    %v170 = vsel %vm167, %v168, %v169
    %v171 = vrot.slane %v106, 2
    %v172 = vsel %vm167, %v169, %v171
    %v173 = vrot.slane %v107, 2
    %v174 = vsel %vm167, %v171, %v173
    %v175 = vrot.slane %v108, 2
    %v176 = vsel %vm167, %v173, %v175
    %v177 = vrot.slane %v109, 2
    %v178 = vrot.slane %v110, 2
    %v179 = vsel %vm167, %v177, %v178
    %v180 = vrot.slane %v111, 2
    %v181 = vsel %vm167, %v178, %v180
    %v182 = vrot.slane %v112, 2
    %v183 = vsel %vm167, %v180, %v182
    %v184 = vrot.slane %v113, 2
    %v185 = vsel %vm167, %v182, %v184
    %186 = vrot.lane.b32.xlu0 %v170, 8
    %v187 = vpop.permute.xlu0 %186
    %188 = vrot.lane.b32.xlu0 %v172, 8
    %v189 = vpop.permute.xlu0 %188
    %190 = vrot.lane.b32.xlu0 %v174, 8
    %v191 = vpop.permute.xlu0 %190
    %192 = vrot.lane.b32.xlu0 %v176, 8
    %v193 = vpop.permute.xlu0 %192
    %194 = vrot.lane.b32.xlu0 %v179, 8
    %v195 = vpop.permute.xlu0 %194
    %196 = vrot.lane.b32.xlu0 %v181, 8
    %v197 = vpop.permute.xlu0 %196
    %198 = vrot.lane.b32.xlu0 %v183, 8
    %v199 = vpop.permute.xlu0 %198
    %200 = vrot.lane.b32.xlu0 %v185, 8
    %v201 = vpop.permute.xlu0 %200
    %vm210 = vcmask 1044480
    %v211 = vrot.slane %v104, 3
    %v212 = vrot.slane %v105, 3
    %v213 = vsel %vm210, %v211, %v212
    %v214 = vrot.slane %v106, 3
    %v215 = vsel %vm210, %v212, %v214
    %v216 = vrot.slane %v107, 3
    %v217 = vsel %vm210, %v214, %v216
    %v218 = vrot.slane %v108, 3
    %v219 = vsel %vm210, %v216, %v218
    %v220 = vrot.slane %v109, 3
    %v221 = vrot.slane %v110, 3
    %v222 = vsel %vm210, %v220, %v221
    %v223 = vrot.slane %v111, 3
    %v224 = vsel %vm210, %v221, %v223
    %v225 = vrot.slane %v112, 3
    %v226 = vsel %vm210, %v223, %v225
    %v227 = vrot.slane %v113, 3
    %v228 = vsel %vm210, %v225, %v227
    %229 = vrot.lane.b32.xlu0 %v213, 12
    %v230 = vpop.permute.xlu0 %229
    %231 = vrot.lane.b32.xlu0 %v215, 12
    %v232 = vpop.permute.xlu0 %231
    %233 = vrot.lane.b32.xlu0 %v217, 12
    %v234 = vpop.permute.xlu0 %233
    %235 = vrot.lane.b32.xlu0 %v219, 12
    %v236 = vpop.permute.xlu0 %235
    %237 = vrot.lane.b32.xlu0 %v222, 12
    %v238 = vpop.permute.xlu0 %237
    %239 = vrot.lane.b32.xlu0 %v224, 12
    %v240 = vpop.permute.xlu0 %239
    %241 = vrot.lane.b32.xlu0 %v226, 12
    %v242 = vpop.permute.xlu0 %241
    %243 = vrot.lane.b32.xlu0 %v228, 12
    %v244 = vpop.permute.xlu0 %243
    %vm253 = vcmask 1043456
    %v254 = vrot.slane %v104, 4
    %v255 = vrot.slane %v105, 4
    %v256 = vsel %vm253, %v254, %v255
    %v257 = vrot.slane %v106, 4
    %v258 = vsel %vm253, %v255, %v257
    %v259 = vrot.slane %v107, 4
    %v260 = vsel %vm253, %v257, %v259
    %v261 = vrot.slane %v108, 4
    %v262 = vsel %vm253, %v259, %v261
    %v263 = vrot.slane %v109, 4
    %v264 = vrot.slane %v110, 4
    %v265 = vsel %vm253, %v263, %v264
    %v266 = vrot.slane %v111, 4
    %v267 = vsel %vm253, %v264, %v266
    %v268 = vrot.slane %v112, 4
    %v269 = vsel %vm253, %v266, %v268
    %v270 = vrot.slane %v113, 4
    %v271 = vsel %vm253, %v268, %v270
    %272 = vrot.lane.b32.xlu0 %v256, 16
    %v273 = vpop.permute.xlu0 %272
    %274 = vrot.lane.b32.xlu0 %v258, 16
    %v275 = vpop.permute.xlu0 %274
    %276 = vrot.lane.b32.xlu0 %v260, 16
    %v277 = vpop.permute.xlu0 %276
    %278 = vrot.lane.b32.xlu0 %v262, 16
    %v279 = vpop.permute.xlu0 %278
    %280 = vrot.lane.b32.xlu0 %v265, 16
    %v281 = vpop.permute.xlu0 %280
    %282 = vrot.lane.b32.xlu0 %v267, 16
    %v283 = vpop.permute.xlu0 %282
    %284 = vrot.lane.b32.xlu0 %v269, 16
    %v285 = vpop.permute.xlu0 %284
    %286 = vrot.lane.b32.xlu0 %v271, 16
    %v287 = vpop.permute.xlu0 %286
    %vm296 = vcmask 1042432
    %v297 = vrot.slane %v104, 5
    %v298 = vrot.slane %v105, 5
    %v299 = vsel %vm296, %v297, %v298
    %v300 = vrot.slane %v106, 5
    %v301 = vsel %vm296, %v298, %v300
    %v302 = vrot.slane %v107, 5
    %v303 = vsel %vm296, %v300, %v302
    %v304 = vrot.slane %v108, 5
    %v305 = vsel %vm296, %v302, %v304
    %v306 = vrot.slane %v109, 5
    %v307 = vrot.slane %v110, 5
    %v308 = vsel %vm296, %v306, %v307
    %v309 = vrot.slane %v111, 5
    %v310 = vsel %vm296, %v307, %v309
    %v311 = vrot.slane %v112, 5
    %v312 = vsel %vm296, %v309, %v311
    %v313 = vrot.slane %v113, 5
    %v314 = vsel %vm296, %v311, %v313
    %315 = vrot.lane.b32.xlu0 %v299, 20
    %v316 = vpop.permute.xlu0 %315
    %317 = vrot.lane.b32.xlu0 %v301, 20
    %v318 = vpop.permute.xlu0 %317
    %319 = vrot.lane.b32.xlu0 %v303, 20
    %v320 = vpop.permute.xlu0 %319
    %321 = vrot.lane.b32.xlu0 %v305, 20
    %v322 = vpop.permute.xlu0 %321
    %323 = vrot.lane.b32.xlu0 %v308, 20
    %v324 = vpop.permute.xlu0 %323
    %325 = vrot.lane.b32.xlu0 %v310, 20
    %v326 = vpop.permute.xlu0 %325
    %327 = vrot.lane.b32.xlu0 %v312, 20
    %v328 = vpop.permute.xlu0 %327
    %329 = vrot.lane.b32.xlu0 %v314, 20
    %v330 = vpop.permute.xlu0 %329
    %vm339 = vcmask 1041408
    %v340 = vrot.slane %v104, 6
    %v341 = vrot.slane %v105, 6
    %v342 = vsel %vm339, %v340, %v341
    %v343 = vrot.slane %v106, 6
    %v344 = vsel %vm339, %v341, %v343
    %v345 = vrot.slane %v107, 6
    %v346 = vsel %vm339, %v343, %v345
    %v347 = vrot.slane %v108, 6
    %v348 = vsel %vm339, %v345, %v347
    %v349 = vrot.slane %v109, 6
    %v350 = vrot.slane %v110, 6
    %v351 = vsel %vm339, %v349, %v350
    %v352 = vrot.slane %v111, 6
    %v353 = vsel %vm339, %v350, %v352
    %v354 = vrot.slane %v112, 6
    %v355 = vsel %vm339, %v352, %v354
    %v356 = vrot.slane %v113, 6
    %v357 = vsel %vm339, %v354, %v356
    %358 = vrot.lane.b32.xlu0 %v342, 24
    %v359 = vpop.permute.xlu0 %358
    %360 = vrot.lane.b32.xlu0 %v344, 24
    %v361 = vpop.permute.xlu0 %360
    %362 = vrot.lane.b32.xlu0 %v346, 24
    %v363 = vpop.permute.xlu0 %362
    %364 = vrot.lane.b32.xlu0 %v348, 24
    %v365 = vpop.permute.xlu0 %364
    %366 = vrot.lane.b32.xlu0 %v351, 24
    %v367 = vpop.permute.xlu0 %366
    %368 = vrot.lane.b32.xlu0 %v353, 24
    %v369 = vpop.permute.xlu0 %368
    %370 = vrot.lane.b32.xlu0 %v355, 24
    %v371 = vpop.permute.xlu0 %370
    %372 = vrot.lane.b32.xlu0 %v357, 24
    %v373 = vpop.permute.xlu0 %372
    %vm382 = vcmask 1040384
    %v383 = vrot.slane %v104, 7
    %v384 = vrot.slane %v105, 7
    %v385 = vsel %vm382, %v383, %v384
    %v386 = vrot.slane %v106, 7
    %v387 = vsel %vm382, %v384, %v386
    %v388 = vrot.slane %v107, 7
    %v389 = vsel %vm382, %v386, %v388
    %v390 = vrot.slane %v108, 7
    %v391 = vsel %vm382, %v388, %v390
    %v392 = vrot.slane %v109, 7
    %v393 = vrot.slane %v110, 7
    %v394 = vsel %vm382, %v392, %v393
    %v395 = vrot.slane %v111, 7
    %v396 = vsel %vm382, %v393, %v395
    %v397 = vrot.slane %v112, 7
    %v398 = vsel %vm382, %v395, %v397
    %v399 = vrot.slane %v113, 7
    %v400 = vsel %vm382, %v397, %v399
    %401 = vrot.lane.b32.xlu0 %v385, 28
    %v402 = vpop.permute.xlu0 %401
    %403 = vrot.lane.b32.xlu0 %v387, 28
    %v404 = vpop.permute.xlu0 %403
    %405 = vrot.lane.b32.xlu0 %v389, 28
    %v406 = vpop.permute.xlu0 %405
    %407 = vrot.lane.b32.xlu0 %v391, 28
    %v408 = vpop.permute.xlu0 %407
    %409 = vrot.lane.b32.xlu0 %v394, 28
    %v410 = vpop.permute.xlu0 %409
    %411 = vrot.lane.b32.xlu0 %v396, 28
    %v412 = vpop.permute.xlu0 %411
    %413 = vrot.lane.b32.xlu0 %v398, 28
    %v414 = vpop.permute.xlu0 %413
    %415 = vrot.lane.b32.xlu0 %v400, 28
    %v416 = vpop.permute.xlu0 %415
    %v425 = vsel %vm75, %v104, %v144
    %v426 = vsel %vm75, %v105, %v146
    %v427 = vsel %vm75, %v106, %v148
    %v428 = vsel %vm75, %v107, %v150
    %v429 = vsel %vm75, %v109, %v152
    %v430 = vsel %vm75, %v110, %v154
    %v431 = vsel %vm75, %v111, %v156
    %v432 = vsel %vm75, %v112, %v158
    %vm433 = vcmask 64512
    %v434 = vsel %vm433, %v425, %v187
    %v435 = vsel %vm433, %v426, %v189
    %v436 = vsel %vm433, %v427, %v191
    %v437 = vsel %vm433, %v428, %v193
    %v438 = vsel %vm433, %v429, %v195
    %v439 = vsel %vm433, %v430, %v197
    %v440 = vsel %vm433, %v431, %v199
    %v441 = vsel %vm433, %v432, %v201
    %vm442 = vcmask 97280
    %v443 = vsel %vm442, %v434, %v230
    %v444 = vsel %vm442, %v435, %v232
    %v445 = vsel %vm442, %v436, %v234
    %v446 = vsel %vm442, %v437, %v236
    %v447 = vsel %vm442, %v438, %v238
    %v448 = vsel %vm442, %v439, %v240
    %v449 = vsel %vm442, %v440, %v242
    %v450 = vsel %vm442, %v441, %v244
    %vm451 = vcmask 130048
    %v452 = vsel %vm451, %v443, %v273
    %v453 = vsel %vm451, %v444, %v275
    %v454 = vsel %vm451, %v445, %v277
    %v455 = vsel %vm451, %v446, %v279
    %v456 = vsel %vm451, %v447, %v281
    %v457 = vsel %vm451, %v448, %v283
    %v458 = vsel %vm451, %v449, %v285
    %v459 = vsel %vm451, %v450, %v287
    %vm460 = vcmask 162816
    %v461 = vsel %vm460, %v452, %v316
    %v462 = vsel %vm460, %v453, %v318
    %v463 = vsel %vm460, %v454, %v320
    %v464 = vsel %vm460, %v455, %v322
    %v465 = vsel %vm460, %v456, %v324
    %v466 = vsel %vm460, %v457, %v326
    %v467 = vsel %vm460, %v458, %v328
    %v468 = vsel %vm460, %v459, %v330
    %vm469 = vcmask 195584
    %v470 = vsel %vm469, %v461, %v359
    %v471 = vsel %vm469, %v462, %v361
    %v472 = vsel %vm469, %v463, %v363
    %v473 = vsel %vm469, %v464, %v365
    %v474 = vsel %vm469, %v465, %v367
    %v475 = vsel %vm469, %v466, %v369
    %v476 = vsel %vm469, %v467, %v371
    %v477 = vsel %vm469, %v468, %v373
    %vm478 = vcmask 228352
    %v479 = vsel %vm478, %v470, %v402
    %v480 = vsel %vm478, %v471, %v404
    %v481 = vsel %vm478, %v472, %v406
    %v482 = vsel %vm478, %v473, %v408
    %v483 = vsel %vm478, %v474, %v410
    %v484 = vsel %vm478, %v475, %v412
    %v485 = vsel %vm478, %v476, %v414
    %v486 = vsel %vm478, %v477, %v416
    %v487 = vld [vmem:[%s1] sm:$0xff]
    %v488 = vld [vmem:[%s1 + $0x8] sm:$0xff]
    %v489 = vld [vmem:[%s1 + $0x10] sm:$0xff]
    %v490 = vld [vmem:[%s1 + $0x18] sm:$0xff]
    %v491 = vld [vmem:[%s2] sm:$0x1]
    %v493 = vperm.slane %v491, 0
    %vm495 = vcmask 261120
    %v497 = vsel %vm495, %v479, 0
    %v500 = vsel %vm495, %v480, 0
    %v503 = vsel %vm495, %v481, 0
    %v506 = vsel %vm495, %v482, 0
    %v509 = vsel %vm495, %v483, 0
    %v512 = vsel %vm495, %v484, 0
    %v515 = vsel %vm495, %v485, 0
    %v518 = vsel %vm495, %v486, 0
    %520 = vmatpush.msra.mxu0 0.0
    %521 = vmatpush.msra.mxu0 0.0
    %522 = vmatpush.msra.mxu0 0.0
    %523 = vmatpush.msra.mxu0 0.0
    %524 = vmatpush.msra.mxu0 0.0
    %525 = vmatpush.msra.mxu0 0.0
    %526 = vmatpush.msra.mxu0 0.0
    %527 = vmatpush.msra.mxu0 0.0
    %528 = vmatpush.msra.mxu0 0.0
    %529 = vmatpush.msra.mxu0 0.0
    %530 = vmatpush.msra.mxu0 0.0
    %531 = vmatpush.msra.mxu0 0.0
    %532 = vmatpush.msra.mxu0 %v490
    %533 = vmatpush.msra.mxu0 %v489
    %534 = vmatpush.msra.mxu0 %v488
    %535 = vmatpush.msra.mxu0 %v487
    %536 = vmatmul.f32.gmra.mxu0 %v497
    %v537 = vpop.f32.mrf.mxu0
    %v538 = vadd.f32 %v493, %v537
    %539 = vmatmul.f32.gmra.mxu0 %v500
    %v540 = vpop.f32.mrf.mxu0
    %v541 = vadd.f32 %v493, %v540
    %542 = vmatmul.f32.gmra.mxu0 %v503
    %v543 = vpop.f32.mrf.mxu0
    %v544 = vadd.f32 %v493, %v543
    %545 = vmatmul.f32.gmra.mxu0 %v506
    %v546 = vpop.f32.mrf.mxu0
    %v547 = vadd.f32 %v493, %v546
    %548 = vmatmul.f32.gmra.mxu0 %v509
    %v549 = vpop.f32.mrf.mxu0
    %v550 = vadd.f32 %v493, %v549
    %551 = vmatmul.f32.gmra.mxu0 %v512
    %v552 = vpop.f32.mrf.mxu0
    %v553 = vadd.f32 %v493, %v552
    %554 = vmatmul.f32.gmra.mxu0 %v515
    %v555 = vpop.f32.mrf.mxu0
    %v556 = vadd.f32 %v493, %v555
    %557 = vmatmul.f32.gmra.mxu0 %v518
    %v558 = vpop.f32.mrf.mxu0
    %v559 = vadd.f32 %v493, %v558
    %560 = vdwg.mxu0
    %v561 = vadd.f32 %v538, %v541
    %v562 = vadd.f32 %v561, %v544
    %v563 = vadd.f32 %v562, %v547
    %v564 = vadd.f32 %v563, %v550
    %v565 = vadd.f32 %v564, %v553
    %v566 = vadd.f32 %v565, %v556
    %v567 = vadd.f32 %v566, %v559
    %v568 = vrot.slane %v567, 4
    %v569 = vadd.f32 %v567, %v568
    %v570 = vrot.slane %v569, 2
    %v571 = vadd.f32 %v569, %v570
    %v572 = vrot.slane %v571, 1
    %v573 = vadd.f32 %v571, %v572
    %v574 = vmul.f32 %v573, 0.015625
    %v575 = vsub.f32 %v538, %v574
    %v576 = vsub.f32 %v541, %v574
    %v577 = vsub.f32 %v544, %v574
    %v578 = vsub.f32 %v547, %v574
    %v579 = vsub.f32 %v550, %v574
    %v580 = vsub.f32 %v553, %v574
    %v581 = vsub.f32 %v556, %v574
    %v582 = vsub.f32 %v559, %v574
    %v583 = vmul.f32 %v575, %v575
    %v584 = vmul.f32 %v576, %v576
    %v585 = vmul.f32 %v577, %v577
    %v586 = vmul.f32 %v578, %v578
    %v587 = vmul.f32 %v579, %v579
    %v588 = vmul.f32 %v580, %v580
    %v589 = vmul.f32 %v581, %v581
    %v590 = vmul.f32 %v582, %v582
    %v591 = vadd.f32 %v583, %v584
    %v592 = vadd.f32 %v591, %v585
    %v593 = vadd.f32 %v592, %v586
    %v594 = vadd.f32 %v593, %v587
    %v595 = vadd.f32 %v594, %v588
    %v596 = vadd.f32 %v595, %v589
    %v597 = vadd.f32 %v596, %v590
    %v598 = vrot.slane %v597, 4
    %v599 = vadd.f32 %v597, %v598
    %v600 = vrot.slane %v599, 2
    %v601 = vadd.f32 %v599, %v600
    %v602 = vrot.slane %v601, 1
    %v603 = vadd.f32 %v601, %v602
    %v604 = vmul.f32 %v603, 0.015625
    %v605 = vld [vmem:[%s3] sm:$0x1]
    %v606 = vadd.f32 %v604, 1e-05
    %v607 = vrsqrt.pop %v606
    %v608 = vmul.f32 %v607, %v606
    %v609 = vmul.f32 %v608, %v607
    %v610 = vmul.f32 0.5, %v609
    %v611 = vsub.f32 1.5, %v610
    %v612 = vmul.f32 %v607, %v611
    %vm613 = vweird.f32 %v606
    %vm614 = vweird.f32 %v607
    %vm615 = vmor %vm613, %vm614
    %v616 = vsel %vm615, %v607, %v612
    %v617 = vmul.f32 %v605, %v616
    %v619 = vperm.slane %v617, 0
    %v621 = vmul.f32 %v575, %v619
    %v622 = vmul.f32 %v576, %v619
    %v623 = vmul.f32 %v577, %v619
    %v624 = vmul.f32 %v578, %v619
    %v625 = vmul.f32 %v579, %v619
    %v626 = vmul.f32 %v580, %v619
    %v627 = vmul.f32 %v581, %v619
    %v628 = vmul.f32 %v582, %v619
    %v629 = vld [vmem:[%s4] sm:$0x1]
    %v631 = vperm.slane %v629, 0
    %v633 = vadd.f32 %v621, %v631
    %v634 = vadd.f32 %v622, %v631
    %v635 = vadd.f32 %v623, %v631
    %v636 = vadd.f32 %v624, %v631
    %v637 = vadd.f32 %v625, %v631
    %v638 = vadd.f32 %v626, %v631
    %v639 = vadd.f32 %v627, %v631
    %v640 = vadd.f32 %v628, %v631
    %v641 = vmax.f32 %v633, 0.0
    %v642 = vmax.f32 %v634, 0.0
    %v643 = vmax.f32 %v635, 0.0
    %v644 = vmax.f32 %v636, 0.0
    %v645 = vmax.f32 %v637, 0.0
    %v646 = vmax.f32 %v638, 0.0
    %v647 = vmax.f32 %v639, 0.0
    %v648 = vmax.f32 %v640, 0.0
    %649 = vst [vmem:[#allocation3 + $0x2] sm:$0xff] %v641
    %650 = vst [vmem:[#allocation3 + $0xa] sm:$0xff] %v642
    %651 = vst [vmem:[#allocation3 + $0x12] sm:$0xff] %v643
    %652 = vst [vmem:[#allocation3 + $0x1a] sm:$0xff] %v644
    %653 = vst [vmem:[#allocation3 + $0x2a] sm:$0xff] %v645
    %654 = vst [vmem:[#allocation3 + $0x32] sm:$0xff] %v646
    %655 = vst [vmem:[#allocation3 + $0x3a] sm:$0xff] %v647
    %656 = vst [vmem:[#allocation3 + $0x42] sm:$0xff] %v648
    %657 = vst [vmem:[#allocation3 - $0x2] sm:$0x4] %v641
    %658 = vst [vmem:[#allocation3 + $0x26] sm:$0x4] %v645
    %659 = vst [vmem:[#allocation3] sm:$0x2] %v641
    %660 = vst [vmem:[#allocation3 + $0x28] sm:$0x2] %v645
    %661 = vst [vmem:[#allocation3 + $0x1c] sm:$0x40] %v644
    %662 = vst [vmem:[#allocation3 + $0x44] sm:$0x40] %v648
    %663 = vst [vmem:[#allocation3 + $0x1e] sm:$0x20] %v644
    %664 = vst [vmem:[#allocation3 + $0x46] sm:$0x20] %v648
    %v665 = vld [vmem:[#allocation3] sm:$0xff]
    %v666 = vld [vmem:[#allocation3 + $0x8] sm:$0xff]
    %v667 = vld [vmem:[#allocation3 + $0x10] sm:$0xff]
    %v668 = vld [vmem:[#allocation3 + $0x18] sm:$0xff]
    %v669 = vld [vmem:[#allocation3 + $0x20] sm:$0xf]
    %v670 = vld [vmem:[#allocation3 + $0x28] sm:$0xff]
    %v671 = vld [vmem:[#allocation3 + $0x30] sm:$0xff]
    %v672 = vld [vmem:[#allocation3 + $0x38] sm:$0xff]
    %v673 = vld [vmem:[#allocation3 + $0x40] sm:$0xff]
    %v674 = vld [vmem:[#allocation3 + $0x48] sm:$0xf]
    %v685 = vrot.slane %v665, 1
    %v686 = vrot.slane %v666, 1
    %v687 = vsel %vm124, %v685, %v686
    %v688 = vrot.slane %v667, 1
    %v689 = vsel %vm124, %v686, %v688
    %v690 = vrot.slane %v668, 1
    %v691 = vsel %vm124, %v688, %v690
    %v692 = vrot.slane %v669, 1
    %v693 = vsel %vm124, %v690, %v692
    %v694 = vrot.slane %v670, 1
    %v695 = vrot.slane %v671, 1
    %v696 = vsel %vm124, %v694, %v695
    %v697 = vrot.slane %v672, 1
    %v698 = vsel %vm124, %v695, %v697
    %v699 = vrot.slane %v673, 1
    %v700 = vsel %vm124, %v697, %v699
    %v701 = vrot.slane %v674, 1
    %v702 = vsel %vm124, %v699, %v701
    %v711 = vrot.slane %v665, 2
    %v712 = vrot.slane %v666, 2
    %v713 = vsel %vm167, %v711, %v712
    %v714 = vrot.slane %v667, 2
    %v715 = vsel %vm167, %v712, %v714
    %v716 = vrot.slane %v668, 2
    %v717 = vsel %vm167, %v714, %v716
    %v718 = vrot.slane %v669, 2
    %v719 = vsel %vm167, %v716, %v718
    %v720 = vrot.slane %v670, 2
    %v721 = vrot.slane %v671, 2
    %v722 = vsel %vm167, %v720, %v721
    %v723 = vrot.slane %v672, 2
    %v724 = vsel %vm167, %v721, %v723
    %v725 = vrot.slane %v673, 2
    %v726 = vsel %vm167, %v723, %v725
    %v727 = vrot.slane %v674, 2
    %v728 = vsel %vm167, %v725, %v727
    %v737 = vrot.slane %v665, 3
    %v738 = vrot.slane %v666, 3
    %v739 = vsel %vm210, %v737, %v738
    %v740 = vrot.slane %v667, 3
    %v741 = vsel %vm210, %v738, %v740
    %v742 = vrot.slane %v668, 3
    %v743 = vsel %vm210, %v740, %v742
    %v744 = vrot.slane %v669, 3
    %v745 = vsel %vm210, %v742, %v744
    %v746 = vrot.slane %v670, 3
    %v747 = vrot.slane %v671, 3
    %v748 = vsel %vm210, %v746, %v747
    %v749 = vrot.slane %v672, 3
    %v750 = vsel %vm210, %v747, %v749
    %v751 = vrot.slane %v673, 3
    %v752 = vsel %vm210, %v749, %v751
    %v753 = vrot.slane %v674, 3
    %v754 = vsel %vm210, %v751, %v753
    %v763 = vrot.slane %v665, 4
    %v764 = vrot.slane %v666, 4
    %v765 = vsel %vm253, %v763, %v764
    %v766 = vrot.slane %v667, 4
    %v767 = vsel %vm253, %v764, %v766
    %v768 = vrot.slane %v668, 4
    %v769 = vsel %vm253, %v766, %v768
    %v770 = vrot.slane %v669, 4
    %v771 = vsel %vm253, %v768, %v770
    %v772 = vrot.slane %v670, 4
    %v773 = vrot.slane %v671, 4
    %v774 = vsel %vm253, %v772, %v773
    %v775 = vrot.slane %v672, 4
    %v776 = vsel %vm253, %v773, %v775
    %v777 = vrot.slane %v673, 4
    %v778 = vsel %vm253, %v775, %v777
    %v779 = vrot.slane %v674, 4
    %v780 = vsel %vm253, %v777, %v779
    %v789 = vld [vmem:[#allocation6] sm:$0xff]
    %v790 = vld [vmem:[#allocation6 + $0x8] sm:$0xff]
    %v791 = vld [vmem:[#allocation6 + $0x10] sm:$0xff]
    %v792 = vld [vmem:[#allocation6 + $0x18] sm:$0xff]
    %v793 = vld [vmem:[#allocation6 + $0x20] sm:$0xff]
    %v794 = vld [vmem:[#allocation6 + $0x28] sm:$0xff]
    %v795 = vld [vmem:[#allocation6 + $0x30] sm:$0xff]
    %v796 = vld [vmem:[#allocation6 + $0x38] sm:$0xff]
    %v797 = vld [vmem:[#allocation6 + $0x40] sm:$0xff]
    %v798 = vld [vmem:[#allocation6 + $0x48] sm:$0xff]
    %v799 = vld [vmem:[#allocation6 + $0x50] sm:$0xff]
    %v800 = vld [vmem:[#allocation6 + $0x58] sm:$0xff]
    %v801 = vld [vmem:[#allocation6 + $0x60] sm:$0xff]
    %v802 = vld [vmem:[#allocation6 + $0x68] sm:$0xff]
    %v803 = vld [vmem:[#allocation6 + $0x70] sm:$0xff]
    %v804 = vld [vmem:[#allocation6 + $0x78] sm:$0xff]
    %v805 = vld [vmem:[#allocation6 + $0x80] sm:$0xff]
    %v806 = vld [vmem:[#allocation6 + $0x88] sm:$0xff]
    %v807 = vld [vmem:[#allocation6 + $0x90] sm:$0xff]
    %v808 = vld [vmem:[#allocation6 + $0x98] sm:$0xff]
    %v809 = vld [vmem:[#allocation6 + $0xa0] sm:$0xff]
    %v810 = vld [vmem:[#allocation6 + $0xa8] sm:$0xff]
    %v811 = vld [vmem:[#allocation6 + $0xb0] sm:$0xff]
    %v812 = vld [vmem:[#allocation6 + $0xb8] sm:$0xff]
    %v813 = vld [vmem:[#allocation6 + $0xc0] sm:$0xff]
    %v814 = vld [vmem:[#allocation6 + $0xc8] sm:$0xff]
    %v815 = vld [vmem:[#allocation6 + $0xd0] sm:$0xff]
    %v816 = vld [vmem:[#allocation6 + $0xd8] sm:$0xff]
    %v817 = vld [vmem:[#allocation6 + $0xe0] sm:$0xff]
    %v818 = vld [vmem:[#allocation6 + $0xe8] sm:$0xff]
    %v819 = vld [vmem:[#allocation6 + $0xf0] sm:$0xff]
    %v820 = vld [vmem:[#allocation6 + $0xf8] sm:$0xff]
    %v821 = vld [vmem:[#allocation6 + $0x100] sm:$0xff]
    %v822 = vld [vmem:[#allocation6 + $0x108] sm:$0xff]
    %v823 = vld [vmem:[#allocation6 + $0x110] sm:$0xff]
    %v824 = vld [vmem:[#allocation6 + $0x118] sm:$0xff]
    %v825 = vld [vmem:[#allocation6 + $0x120] sm:$0xff]
    %v826 = vld [vmem:[#allocation6 + $0x128] sm:$0xff]
    %v827 = vld [vmem:[#allocation6 + $0x130] sm:$0xff]
    %v828 = vld [vmem:[#allocation6 + $0x138] sm:$0xff]
    %v829 = vld [vmem:[#allocation6 + $0x140] sm:$0xff]
    %v830 = vld [vmem:[#allocation6 + $0x148] sm:$0xff]
    %v831 = vld [vmem:[#allocation6 + $0x150] sm:$0xff]
    %v832 = vld [vmem:[#allocation6 + $0x158] sm:$0xff]
    %v833 = vld [vmem:[#allocation6 + $0x160] sm:$0xff]
    %v834 = vld [vmem:[#allocation6 + $0x168] sm:$0xff]
    %v835 = vld [vmem:[#allocation6 + $0x170] sm:$0xff]
    %v836 = vld [vmem:[#allocation6 + $0x178] sm:$0xff]
    %v837 = vld [vmem:[#allocation6 + $0x180] sm:$0xff]
    %v838 = vld [vmem:[#allocation6 + $0x188] sm:$0xff]
    %v839 = vld [vmem:[#allocation6 + $0x190] sm:$0xff]
    %v840 = vld [vmem:[#allocation6 + $0x198] sm:$0xff]
    %v841 = vld [vmem:[#allocation6 + $0x1a0] sm:$0xff]
    %v842 = vld [vmem:[#allocation6 + $0x1a8] sm:$0xff]
    %v843 = vld [vmem:[#allocation6 + $0x1b0] sm:$0xff]
    %v844 = vld [vmem:[#allocation6 + $0x1b8] sm:$0xff]
    %v845 = vld [vmem:[#allocation6 + $0x1c0] sm:$0xff]
    %v846 = vld [vmem:[#allocation6 + $0x1c8] sm:$0xff]
    %v847 = vld [vmem:[#allocation6 + $0x1d0] sm:$0xff]
    %v848 = vld [vmem:[#allocation6 + $0x1d8] sm:$0xff]
    %v849 = vld [vmem:[#allocation6 + $0x1e0] sm:$0xff]
    %v850 = vld [vmem:[#allocation6 + $0x1e8] sm:$0xff]
    %v851 = vld [vmem:[#allocation6 + $0x1f0] sm:$0xff]
    %v852 = vld [vmem:[#allocation6 + $0x1f8] sm:$0xff]
    %v853 = vld [vmem:[#allocation6 + $0x200] sm:$0xff]
    %v854 = vld [vmem:[#allocation6 + $0x208] sm:$0xff]
    %v855 = vld [vmem:[#allocation6 + $0x210] sm:$0xff]
    %v856 = vld [vmem:[#allocation6 + $0x218] sm:$0xff]
    %v857 = vld [vmem:[#allocation6 + $0x220] sm:$0xff]
    %v858 = vld [vmem:[#allocation6 + $0x228] sm:$0xff]
    %v859 = vld [vmem:[#allocation6 + $0x230] sm:$0xff]
    %v860 = vld [vmem:[#allocation6 + $0x238] sm:$0xff]
    %v861 = vld [vmem:[#allocation6 + $0x240] sm:$0xff]
    %v862 = vld [vmem:[#allocation6 + $0x248] sm:$0xff]
    %v863 = vld [vmem:[#allocation6 + $0x250] sm:$0xff]
    %v864 = vld [vmem:[#allocation6 + $0x258] sm:$0xff]
    %v865 = vld [vmem:[#allocation6 + $0x260] sm:$0xff]
    %v866 = vld [vmem:[#allocation6 + $0x268] sm:$0xff]
    %v867 = vld [vmem:[#allocation6 + $0x270] sm:$0xff]
    %v868 = vld [vmem:[#allocation6 + $0x278] sm:$0xff]
    %v869 = vld [vmem:[#allocation6 + $0x280] sm:$0xff]
    %v870 = vld [vmem:[#allocation6 + $0x288] sm:$0xff]
    %v871 = vld [vmem:[#allocation6 + $0x290] sm:$0xff]
    %v872 = vld [vmem:[#allocation6 + $0x298] sm:$0xff]
    %v873 = vld [vmem:[#allocation6 + $0x2a0] sm:$0xff]
    %v874 = vld [vmem:[#allocation6 + $0x2a8] sm:$0xff]
    %v875 = vld [vmem:[#allocation6 + $0x2b0] sm:$0xff]
    %v876 = vld [vmem:[#allocation6 + $0x2b8] sm:$0xff]
    %v877 = vld [vmem:[#allocation6 + $0x2c0] sm:$0xff]
    %v878 = vld [vmem:[#allocation6 + $0x2c8] sm:$0xff]
    %v879 = vld [vmem:[#allocation6 + $0x2d0] sm:$0xff]
    %v880 = vld [vmem:[#allocation6 + $0x2d8] sm:$0xff]
    %v881 = vld [vmem:[#allocation6 + $0x2e0] sm:$0xff]
    %v882 = vld [vmem:[#allocation6 + $0x2e8] sm:$0xff]
    %v883 = vld [vmem:[#allocation6 + $0x2f0] sm:$0xff]
    %v884 = vld [vmem:[#allocation6 + $0x2f8] sm:$0xff]
    %v885 = vld [vmem:[#allocation6 + $0x300] sm:$0xff]
    %v886 = vld [vmem:[#allocation6 + $0x308] sm:$0xff]
    %v887 = vld [vmem:[#allocation6 + $0x310] sm:$0xff]
    %v888 = vld [vmem:[#allocation6 + $0x318] sm:$0xff]
    %v889 = vld [vmem:[#allocation6 + $0x320] sm:$0xff]
    %v890 = vld [vmem:[#allocation6 + $0x328] sm:$0xff]
    %v891 = vld [vmem:[#allocation6 + $0x330] sm:$0xff]
    %v892 = vld [vmem:[#allocation6 + $0x338] sm:$0xff]
    %v893 = vld [vmem:[#allocation6 + $0x340] sm:$0xff]
    %v894 = vld [vmem:[#allocation6 + $0x348] sm:$0xff]
    %v895 = vld [vmem:[#allocation6 + $0x350] sm:$0xff]
    %v896 = vld [vmem:[#allocation6 + $0x358] sm:$0xff]
    %v897 = vld [vmem:[#allocation6 + $0x360] sm:$0xff]
    %v898 = vld [vmem:[#allocation6 + $0x368] sm:$0xff]
    %v899 = vld [vmem:[#allocation6 + $0x370] sm:$0xff]
    %v900 = vld [vmem:[#allocation6 + $0x378] sm:$0xff]
    %v901 = vld [vmem:[#allocation6 + $0x380] sm:$0xff]
    %v902 = vld [vmem:[#allocation6 + $0x388] sm:$0xff]
    %v903 = vld [vmem:[#allocation6 + $0x390] sm:$0xff]
    %v904 = vld [vmem:[#allocation6 + $0x398] sm:$0xff]
    %v905 = vld [vmem:[#allocation6 + $0x3a0] sm:$0xff]
    %v906 = vld [vmem:[#allocation6 + $0x3a8] sm:$0xff]
    %v907 = vld [vmem:[#allocation6 + $0x3b0] sm:$0xff]
    %v908 = vld [vmem:[#allocation6 + $0x3b8] sm:$0xff]
    %v909 = vld [vmem:[#allocation6 + $0x3c0] sm:$0xff]
    %v910 = vld [vmem:[#allocation6 + $0x3c8] sm:$0xff]
    %v911 = vld [vmem:[#allocation6 + $0x3d0] sm:$0xff]
    %v912 = vld [vmem:[#allocation6 + $0x3d8] sm:$0xff]
    %v913 = vld [vmem:[#allocation6 + $0x3e0] sm:$0xff]
    %v914 = vld [vmem:[#allocation6 + $0x3e8] sm:$0xff]
    %v915 = vld [vmem:[#allocation6 + $0x3f0] sm:$0xff]
    %v916 = vld [vmem:[#allocation6 + $0x3f8] sm:$0xff]
    %v917 = vld [vmem:[#allocation6 + $0x400] sm:$0xff]
    %v918 = vld [vmem:[#allocation6 + $0x408] sm:$0xff]
    %v919 = vld [vmem:[#allocation6 + $0x410] sm:$0xff]
    %v920 = vld [vmem:[#allocation6 + $0x418] sm:$0xff]
    %v921 = vld [vmem:[#allocation6 + $0x420] sm:$0xff]
    %v922 = vld [vmem:[#allocation6 + $0x428] sm:$0xff]
    %v923 = vld [vmem:[#allocation6 + $0x430] sm:$0xff]
    %v924 = vld [vmem:[#allocation6 + $0x438] sm:$0xff]
    %v925 = vld [vmem:[#allocation6 + $0x440] sm:$0xff]
    %v926 = vld [vmem:[#allocation6 + $0x448] sm:$0xff]
    %v927 = vld [vmem:[#allocation6 + $0x450] sm:$0xff]
    %v928 = vld [vmem:[#allocation6 + $0x458] sm:$0xff]
    %v929 = vld [vmem:[#allocation6 + $0x460] sm:$0xff]
    %v930 = vld [vmem:[#allocation6 + $0x468] sm:$0xff]
    %v931 = vld [vmem:[#allocation6 + $0x470] sm:$0xff]
    %v932 = vld [vmem:[#allocation6 + $0x478] sm:$0xff]
    %v933 = vld [vmem:[#allocation6 + $0x480] sm:$0xff]
    %v934 = vld [vmem:[#allocation6 + $0x488] sm:$0xff]
    %v935 = vld [vmem:[#allocation6 + $0x490] sm:$0xff]
    %v936 = vld [vmem:[#allocation6 + $0x498] sm:$0xff]
    %v937 = vld [vmem:[#allocation6 + $0x4a0] sm:$0xff]
    %v938 = vld [vmem:[#allocation6 + $0x4a8] sm:$0xff]
    %v939 = vld [vmem:[#allocation6 + $0x4b0] sm:$0xff]
    %v940 = vld [vmem:[#allocation6 + $0x4b8] sm:$0xff]
    %v941 = vld [vmem:[#allocation6 + $0x4c0] sm:$0xff]
    %v942 = vld [vmem:[#allocation6 + $0x4c8] sm:$0xff]
    %v943 = vld [vmem:[#allocation6 + $0x4d0] sm:$0xff]
    %v944 = vld [vmem:[#allocation6 + $0x4d8] sm:$0xff]
    %v945 = vld [vmem:[#allocation6 + $0x4e0] sm:$0xff]
    %v946 = vld [vmem:[#allocation6 + $0x4e8] sm:$0xff]
    %v947 = vld [vmem:[#allocation6 + $0x4f0] sm:$0xff]
    %v948 = vld [vmem:[#allocation6 + $0x4f8] sm:$0xff]
    %v949 = vld [vmem:[%s6] sm:$0x3]
    %v951 = vperm.slane %v949, 0
    %v952 = vperm.slane %v949, 1
    %955 = vmatpush.msra.mxu0 %v819
    %956 = vmatpush.msra.mxu0 %v817
    %957 = vmatpush.msra.mxu0 %v815
    %958 = vmatpush.msra.mxu0 %v813
    %959 = vmatpush.msra.mxu0 %v811
    %960 = vmatpush.msra.mxu0 %v809
    %961 = vmatpush.msra.mxu0 %v807
    %962 = vmatpush.msra.mxu0 %v805
    %963 = vmatpush.msra.mxu0 %v803
    %964 = vmatpush.msra.mxu0 %v801
    %965 = vmatpush.msra.mxu0 %v799
    %966 = vmatpush.msra.mxu0 %v797
    %967 = vmatpush.msra.mxu0 %v795
    %968 = vmatpush.msra.mxu0 %v793
    %969 = vmatpush.msra.mxu0 %v791
    %970 = vmatpush.msra.mxu0 %v789
    %971 = vmatmul.f32.gmra.mxu0 %v665
    %v972 = vpop.f32.mrf.mxu0
    %v973 = vadd.f32 %v951, %v972
    %974 = vmatmul.f32.gmra.mxu0 %v666
    %v975 = vpop.f32.mrf.mxu0
    %v976 = vadd.f32 %v951, %v975
    %977 = vmatmul.f32.gmra.mxu0 %v667
    %v978 = vpop.f32.mrf.mxu0
    %v979 = vadd.f32 %v951, %v978
    %980 = vmatmul.f32.gmra.mxu0 %v668
    %v981 = vpop.f32.mrf.mxu0
    %v982 = vadd.f32 %v951, %v981
    %983 = vmatmul.f32.gmra.mxu0 %v670
    %v984 = vpop.f32.mrf.mxu0
    %v985 = vadd.f32 %v951, %v984
    %986 = vmatmul.f32.gmra.mxu0 %v671
    %v987 = vpop.f32.mrf.mxu0
    %v988 = vadd.f32 %v951, %v987
    %989 = vmatmul.f32.gmra.mxu0 %v672
    %v990 = vpop.f32.mrf.mxu0
    %v991 = vadd.f32 %v951, %v990
    %992 = vmatmul.f32.gmra.mxu0 %v673
    %v993 = vpop.f32.mrf.mxu0
    %v994 = vadd.f32 %v951, %v993
    %995 = vdwg.mxu0
    %996 = vmatpush.msra.mxu0 %v851
    %997 = vmatpush.msra.mxu0 %v849
    %998 = vmatpush.msra.mxu0 %v847
    %999 = vmatpush.msra.mxu0 %v845
    %1000 = vmatpush.msra.mxu0 %v843
    %1001 = vmatpush.msra.mxu0 %v841
    %1002 = vmatpush.msra.mxu0 %v839
    %1003 = vmatpush.msra.mxu0 %v837
    %1004 = vmatpush.msra.mxu0 %v835
    %1005 = vmatpush.msra.mxu0 %v833
    %1006 = vmatpush.msra.mxu0 %v831
    %1007 = vmatpush.msra.mxu0 %v829
    %1008 = vmatpush.msra.mxu0 %v827
    %1009 = vmatpush.msra.mxu0 %v825
    %1010 = vmatpush.msra.mxu0 %v823
    %1011 = vmatpush.msra.mxu0 %v821
    %1012 = vmatmul.f32.gmra.mxu0 %v687
    %v1013 = vpop.f32.mrf.mxu0
    %v1014 = vadd.f32 %v973, %v1013
    %1015 = vmatmul.f32.gmra.mxu0 %v689
    %v1016 = vpop.f32.mrf.mxu0
    %v1017 = vadd.f32 %v976, %v1016
    %1018 = vmatmul.f32.gmra.mxu0 %v691
    %v1019 = vpop.f32.mrf.mxu0
    %v1020 = vadd.f32 %v979, %v1019
    %1021 = vmatmul.f32.gmra.mxu0 %v693
    %v1022 = vpop.f32.mrf.mxu0
    %v1023 = vadd.f32 %v982, %v1022
    %1024 = vmatmul.f32.gmra.mxu0 %v696
    %v1025 = vpop.f32.mrf.mxu0
    %v1026 = vadd.f32 %v985, %v1025
    %1027 = vmatmul.f32.gmra.mxu0 %v698
    %v1028 = vpop.f32.mrf.mxu0
    %v1029 = vadd.f32 %v988, %v1028
    %1030 = vmatmul.f32.gmra.mxu0 %v700
    %v1031 = vpop.f32.mrf.mxu0
    %v1032 = vadd.f32 %v991, %v1031
    %1033 = vmatmul.f32.gmra.mxu0 %v702
    %v1034 = vpop.f32.mrf.mxu0
    %v1035 = vadd.f32 %v994, %v1034
    %1036 = vdwg.mxu0
    %1037 = vmatpush.msra.mxu0 %v883
    %1038 = vmatpush.msra.mxu0 %v881
    %1039 = vmatpush.msra.mxu0 %v879
    %1040 = vmatpush.msra.mxu0 %v877
    %1041 = vmatpush.msra.mxu0 %v875
    %1042 = vmatpush.msra.mxu0 %v873
    %1043 = vmatpush.msra.mxu0 %v871
    %1044 = vmatpush.msra.mxu0 %v869
    %1045 = vmatpush.msra.mxu0 %v867
    %1046 = vmatpush.msra.mxu0 %v865
    %1047 = vmatpush.msra.mxu0 %v863
    %1048 = vmatpush.msra.mxu0 %v861
    %1049 = vmatpush.msra.mxu0 %v859
    %1050 = vmatpush.msra.mxu0 %v857
    %1051 = vmatpush.msra.mxu0 %v855
    %1052 = vmatpush.msra.mxu0 %v853
    %1053 = vmatmul.f32.gmra.mxu0 %v713
    %v1054 = vpop.f32.mrf.mxu0
    %v1055 = vadd.f32 %v1014, %v1054
    %1056 = vmatmul.f32.gmra.mxu0 %v715
    %v1057 = vpop.f32.mrf.mxu0
    %v1058 = vadd.f32 %v1017, %v1057
    %1059 = vmatmul.f32.gmra.mxu0 %v717
    %v1060 = vpop.f32.mrf.mxu0
    %v1061 = vadd.f32 %v1020, %v1060
    %1062 = vmatmul.f32.gmra.mxu0 %v719
    %v1063 = vpop.f32.mrf.mxu0
    %v1064 = vadd.f32 %v1023, %v1063
    %1065 = vmatmul.f32.gmra.mxu0 %v722
    %v1066 = vpop.f32.mrf.mxu0
    %v1067 = vadd.f32 %v1026, %v1066
    %1068 = vmatmul.f32.gmra.mxu0 %v724
    %v1069 = vpop.f32.mrf.mxu0
    %v1070 = vadd.f32 %v1029, %v1069
    %1071 = vmatmul.f32.gmra.mxu0 %v726
    %v1072 = vpop.f32.mrf.mxu0
    %v1073 = vadd.f32 %v1032, %v1072
    %1074 = vmatmul.f32.gmra.mxu0 %v728
    %v1075 = vpop.f32.mrf.mxu0
    %v1076 = vadd.f32 %v1035, %v1075
    %1077 = vdwg.mxu0
    %1078 = vmatpush.msra.mxu0 %v915
    %1079 = vmatpush.msra.mxu0 %v913
    %1080 = vmatpush.msra.mxu0 %v911
    %1081 = vmatpush.msra.mxu0 %v909
    %1082 = vmatpush.msra.mxu0 %v907
    %1083 = vmatpush.msra.mxu0 %v905
    %1084 = vmatpush.msra.mxu0 %v903
    %1085 = vmatpush.msra.mxu0 %v901
    %1086 = vmatpush.msra.mxu0 %v899
    %1087 = vmatpush.msra.mxu0 %v897
    %1088 = vmatpush.msra.mxu0 %v895
    %1089 = vmatpush.msra.mxu0 %v893
    %1090 = vmatpush.msra.mxu0 %v891
    %1091 = vmatpush.msra.mxu0 %v889
    %1092 = vmatpush.msra.mxu0 %v887
    %1093 = vmatpush.msra.mxu0 %v885
    %1094 = vmatmul.f32.gmra.mxu0 %v739
    %v1095 = vpop.f32.mrf.mxu0
    %v1096 = vadd.f32 %v1055, %v1095
    %1097 = vmatmul.f32.gmra.mxu0 %v741
    %v1098 = vpop.f32.mrf.mxu0
    %v1099 = vadd.f32 %v1058, %v1098
    %1100 = vmatmul.f32.gmra.mxu0 %v743
    %v1101 = vpop.f32.mrf.mxu0
    %v1102 = vadd.f32 %v1061, %v1101
    %1103 = vmatmul.f32.gmra.mxu0 %v745
    %v1104 = vpop.f32.mrf.mxu0
    %v1105 = vadd.f32 %v1064, %v1104
    %1106 = vmatmul.f32.gmra.mxu0 %v748
    %v1107 = vpop.f32.mrf.mxu0
    %v1108 = vadd.f32 %v1067, %v1107
    %1109 = vmatmul.f32.gmra.mxu0 %v750
    %v1110 = vpop.f32.mrf.mxu0
    %v1111 = vadd.f32 %v1070, %v1110
    %1112 = vmatmul.f32.gmra.mxu0 %v752
    %v1113 = vpop.f32.mrf.mxu0
    %v1114 = vadd.f32 %v1073, %v1113
    %1115 = vmatmul.f32.gmra.mxu0 %v754
    %v1116 = vpop.f32.mrf.mxu0
    %v1117 = vadd.f32 %v1076, %v1116
    %1118 = vdwg.mxu0
    %1119 = vmatpush.msra.mxu0 %v947
    %1120 = vmatpush.msra.mxu0 %v945
    %1121 = vmatpush.msra.mxu0 %v943
    %1122 = vmatpush.msra.mxu0 %v941
    %1123 = vmatpush.msra.mxu0 %v939
    %1124 = vmatpush.msra.mxu0 %v937
    %1125 = vmatpush.msra.mxu0 %v935
    %1126 = vmatpush.msra.mxu0 %v933
    %1127 = vmatpush.msra.mxu0 %v931
    %1128 = vmatpush.msra.mxu0 %v929
    %1129 = vmatpush.msra.mxu0 %v927
    %1130 = vmatpush.msra.mxu0 %v925
    %1131 = vmatpush.msra.mxu0 %v923
    %1132 = vmatpush.msra.mxu0 %v921
    %1133 = vmatpush.msra.mxu0 %v919
    %1134 = vmatpush.msra.mxu0 %v917
    %1135 = vmatmul.f32.gmra.mxu0 %v765
    %v1136 = vpop.f32.mrf.mxu0
    %v1137 = vadd.f32 %v1096, %v1136
    %1138 = vmatmul.f32.gmra.mxu0 %v767
    %v1139 = vpop.f32.mrf.mxu0
    %v1140 = vadd.f32 %v1099, %v1139
    %1141 = vmatmul.f32.gmra.mxu0 %v769
    %v1142 = vpop.f32.mrf.mxu0
    %v1143 = vadd.f32 %v1102, %v1142
    %1144 = vmatmul.f32.gmra.mxu0 %v771
    %v1145 = vpop.f32.mrf.mxu0
    %v1146 = vadd.f32 %v1105, %v1145
    %1147 = vmatmul.f32.gmra.mxu0 %v774
    %v1148 = vpop.f32.mrf.mxu0
    %v1149 = vadd.f32 %v1108, %v1148
    %1150 = vmatmul.f32.gmra.mxu0 %v776
    %v1151 = vpop.f32.mrf.mxu0
    %v1152 = vadd.f32 %v1111, %v1151
    %1153 = vmatmul.f32.gmra.mxu0 %v778
    %v1154 = vpop.f32.mrf.mxu0
    %v1155 = vadd.f32 %v1114, %v1154
    %1156 = vmatmul.f32.gmra.mxu0 %v780
    %v1157 = vpop.f32.mrf.mxu0
    %v1158 = vadd.f32 %v1117, %v1157
    %1159 = vdwg.mxu0
    %1160 = vmatpush.msra.mxu0 %v820
    %1161 = vmatpush.msra.mxu0 %v818
    %1162 = vmatpush.msra.mxu0 %v816
    %1163 = vmatpush.msra.mxu0 %v814
    %1164 = vmatpush.msra.mxu0 %v812
    %1165 = vmatpush.msra.mxu0 %v810
    %1166 = vmatpush.msra.mxu0 %v808
    %1167 = vmatpush.msra.mxu0 %v806
    %1168 = vmatpush.msra.mxu0 %v804
    %1169 = vmatpush.msra.mxu0 %v802
    %1170 = vmatpush.msra.mxu0 %v800
    %1171 = vmatpush.msra.mxu0 %v798
    %1172 = vmatpush.msra.mxu0 %v796
    %1173 = vmatpush.msra.mxu0 %v794
    %1174 = vmatpush.msra.mxu0 %v792
    %1175 = vmatpush.msra.mxu0 %v790
    %1176 = vmatmul.f32.gmra.mxu0 %v665
    %v1177 = vpop.f32.mrf.mxu0
    %v1178 = vadd.f32 %v952, %v1177
    %1179 = vmatmul.f32.gmra.mxu0 %v666
    %v1180 = vpop.f32.mrf.mxu0
    %v1181 = vadd.f32 %v952, %v1180
    %1182 = vmatmul.f32.gmra.mxu0 %v667
    %v1183 = vpop.f32.mrf.mxu0
    %v1184 = vadd.f32 %v952, %v1183
    %1185 = vmatmul.f32.gmra.mxu0 %v668
    %v1186 = vpop.f32.mrf.mxu0
    %v1187 = vadd.f32 %v952, %v1186
    %1188 = vmatmul.f32.gmra.mxu0 %v670
    %v1189 = vpop.f32.mrf.mxu0
    %v1190 = vadd.f32 %v952, %v1189
    %1191 = vmatmul.f32.gmra.mxu0 %v671
    %v1192 = vpop.f32.mrf.mxu0
    %v1193 = vadd.f32 %v952, %v1192
    %1194 = vmatmul.f32.gmra.mxu0 %v672
    %v1195 = vpop.f32.mrf.mxu0
    %v1196 = vadd.f32 %v952, %v1195
    %1197 = vmatmul.f32.gmra.mxu0 %v673
    %v1198 = vpop.f32.mrf.mxu0
    %v1199 = vadd.f32 %v952, %v1198
    %1200 = vdwg.mxu0
    %1201 = vmatpush.msra.mxu0 %v852
    %1202 = vmatpush.msra.mxu0 %v850
    %1203 = vmatpush.msra.mxu0 %v848
    %1204 = vmatpush.msra.mxu0 %v846
    %1205 = vmatpush.msra.mxu0 %v844
    %1206 = vmatpush.msra.mxu0 %v842
    %1207 = vmatpush.msra.mxu0 %v840
    %1208 = vmatpush.msra.mxu0 %v838
    %1209 = vmatpush.msra.mxu0 %v836
    %1210 = vmatpush.msra.mxu0 %v834
    %1211 = vmatpush.msra.mxu0 %v832
    %1212 = vmatpush.msra.mxu0 %v830
    %1213 = vmatpush.msra.mxu0 %v828
    %1214 = vmatpush.msra.mxu0 %v826
    %1215 = vmatpush.msra.mxu0 %v824
    %1216 = vmatpush.msra.mxu0 %v822
    %1217 = vmatmul.f32.gmra.mxu0 %v687
    %v1218 = vpop.f32.mrf.mxu0
    %v1219 = vadd.f32 %v1178, %v1218
    %1220 = vmatmul.f32.gmra.mxu0 %v689
    %v1221 = vpop.f32.mrf.mxu0
    %v1222 = vadd.f32 %v1181, %v1221
    %1223 = vmatmul.f32.gmra.mxu0 %v691
    %v1224 = vpop.f32.mrf.mxu0
    %v1225 = vadd.f32 %v1184, %v1224
    %1226 = vmatmul.f32.gmra.mxu0 %v693
    %v1227 = vpop.f32.mrf.mxu0
    %v1228 = vadd.f32 %v1187, %v1227
    %1229 = vmatmul.f32.gmra.mxu0 %v696
    %v1230 = vpop.f32.mrf.mxu0
    %v1231 = vadd.f32 %v1190, %v1230
    %1232 = vmatmul.f32.gmra.mxu0 %v698
    %v1233 = vpop.f32.mrf.mxu0
    %v1234 = vadd.f32 %v1193, %v1233
    %1235 = vmatmul.f32.gmra.mxu0 %v700
    %v1236 = vpop.f32.mrf.mxu0
    %v1237 = vadd.f32 %v1196, %v1236
    %1238 = vmatmul.f32.gmra.mxu0 %v702
    %v1239 = vpop.f32.mrf.mxu0
    %v1240 = vadd.f32 %v1199, %v1239
    %1241 = vdwg.mxu0
    %1242 = vmatpush.msra.mxu0 %v884
    %1243 = vmatpush.msra.mxu0 %v882
    %1244 = vmatpush.msra.mxu0 %v880
    %1245 = vmatpush.msra.mxu0 %v878
    %1246 = vmatpush.msra.mxu0 %v876
    %1247 = vmatpush.msra.mxu0 %v874
    %1248 = vmatpush.msra.mxu0 %v872
    %1249 = vmatpush.msra.mxu0 %v870
    %1250 = vmatpush.msra.mxu0 %v868
    %1251 = vmatpush.msra.mxu0 %v866
    %1252 = vmatpush.msra.mxu0 %v864
    %1253 = vmatpush.msra.mxu0 %v862
    %1254 = vmatpush.msra.mxu0 %v860
    %1255 = vmatpush.msra.mxu0 %v858
    %1256 = vmatpush.msra.mxu0 %v856
    %1257 = vmatpush.msra.mxu0 %v854
    %1258 = vmatmul.f32.gmra.mxu0 %v713
    %v1259 = vpop.f32.mrf.mxu0
    %v1260 = vadd.f32 %v1219, %v1259
    %1261 = vmatmul.f32.gmra.mxu0 %v715
    %v1262 = vpop.f32.mrf.mxu0
    %v1263 = vadd.f32 %v1222, %v1262
    %1264 = vmatmul.f32.gmra.mxu0 %v717
    %v1265 = vpop.f32.mrf.mxu0
    %v1266 = vadd.f32 %v1225, %v1265
    %1267 = vmatmul.f32.gmra.mxu0 %v719
    %v1268 = vpop.f32.mrf.mxu0
    %v1269 = vadd.f32 %v1228, %v1268
    %1270 = vmatmul.f32.gmra.mxu0 %v722
    %v1271 = vpop.f32.mrf.mxu0
    %v1272 = vadd.f32 %v1231, %v1271
    %1273 = vmatmul.f32.gmra.mxu0 %v724
    %v1274 = vpop.f32.mrf.mxu0
    %v1275 = vadd.f32 %v1234, %v1274
    %1276 = vmatmul.f32.gmra.mxu0 %v726
    %v1277 = vpop.f32.mrf.mxu0
    %v1278 = vadd.f32 %v1237, %v1277
    %1279 = vmatmul.f32.gmra.mxu0 %v728
    %v1280 = vpop.f32.mrf.mxu0
    %v1281 = vadd.f32 %v1240, %v1280
    %1282 = vdwg.mxu0
    %1283 = vmatpush.msra.mxu0 %v916
    %1284 = vmatpush.msra.mxu0 %v914
    %1285 = vmatpush.msra.mxu0 %v912
    %1286 = vmatpush.msra.mxu0 %v910
    %1287 = vmatpush.msra.mxu0 %v908
    %1288 = vmatpush.msra.mxu0 %v906
    %1289 = vmatpush.msra.mxu0 %v904
    %1290 = vmatpush.msra.mxu0 %v902
    %1291 = vmatpush.msra.mxu0 %v900
    %1292 = vmatpush.msra.mxu0 %v898
    %1293 = vmatpush.msra.mxu0 %v896
    %1294 = vmatpush.msra.mxu0 %v894
    %1295 = vmatpush.msra.mxu0 %v892
    %1296 = vmatpush.msra.mxu0 %v890
    %1297 = vmatpush.msra.mxu0 %v888
    %1298 = vmatpush.msra.mxu0 %v886
    %1299 = vmatmul.f32.gmra.mxu0 %v739
    %v1300 = vpop.f32.mrf.mxu0
    %v1301 = vadd.f32 %v1260, %v1300
    %1302 = vmatmul.f32.gmra.mxu0 %v741
    %v1303 = vpop.f32.mrf.mxu0
    %v1304 = vadd.f32 %v1263, %v1303
    %1305 = vmatmul.f32.gmra.mxu0 %v743
    %v1306 = vpop.f32.mrf.mxu0
    %v1307 = vadd.f32 %v1266, %v1306
    %1308 = vmatmul.f32.gmra.mxu0 %v745
    %v1309 = vpop.f32.mrf.mxu0
    %v1310 = vadd.f32 %v1269, %v1309
    %1311 = vmatmul.f32.gmra.mxu0 %v748
    %v1312 = vpop.f32.mrf.mxu0
    %v1313 = vadd.f32 %v1272, %v1312
    %1314 = vmatmul.f32.gmra.mxu0 %v750
    %v1315 = vpop.f32.mrf.mxu0
    %v1316 = vadd.f32 %v1275, %v1315
    %1317 = vmatmul.f32.gmra.mxu0 %v752
    %v1318 = vpop.f32.mrf.mxu0
    %v1319 = vadd.f32 %v1278, %v1318
    %1320 = vmatmul.f32.gmra.mxu0 %v754
    %v1321 = vpop.f32.mrf.mxu0
    %v1322 = vadd.f32 %v1281, %v1321
    %1323 = vdwg.mxu0
    %1324 = vmatpush.msra.mxu0 %v948
    %1325 = vmatpush.msra.mxu0 %v946
    %1326 = vmatpush.msra.mxu0 %v944
    %1327 = vmatpush.msra.mxu0 %v942
    %1328 = vmatpush.msra.mxu0 %v940
    %1329 = vmatpush.msra.mxu0 %v938
    %1330 = vmatpush.msra.mxu0 %v936
    %1331 = vmatpush.msra.mxu0 %v934
    %1332 = vmatpush.msra.mxu0 %v932
    %1333 = vmatpush.msra.mxu0 %v930
    %1334 = vmatpush.msra.mxu0 %v928
    %1335 = vmatpush.msra.mxu0 %v926
    %1336 = vmatpush.msra.mxu0 %v924
    %1337 = vmatpush.msra.mxu0 %v922
    %1338 = vmatpush.msra.mxu0 %v920
    %1339 = vmatpush.msra.mxu0 %v918
    %1340 = vmatmul.f32.gmra.mxu0 %v765
    %v1341 = vpop.f32.mrf.mxu0
    %v1342 = vadd.f32 %v1301, %v1341
    %1343 = vmatmul.f32.gmra.mxu0 %v767
    %v1344 = vpop.f32.mrf.mxu0
    %v1345 = vadd.f32 %v1304, %v1344
    %1346 = vmatmul.f32.gmra.mxu0 %v769
    %v1347 = vpop.f32.mrf.mxu0
    %v1348 = vadd.f32 %v1307, %v1347
    %1349 = vmatmul.f32.gmra.mxu0 %v771
    %v1350 = vpop.f32.mrf.mxu0
    %v1351 = vadd.f32 %v1310, %v1350
    %1352 = vmatmul.f32.gmra.mxu0 %v774
    %v1353 = vpop.f32.mrf.mxu0
    %v1354 = vadd.f32 %v1313, %v1353
    %1355 = vmatmul.f32.gmra.mxu0 %v776
    %v1356 = vpop.f32.mrf.mxu0
    %v1357 = vadd.f32 %v1316, %v1356
    %1358 = vmatmul.f32.gmra.mxu0 %v778
    %v1359 = vpop.f32.mrf.mxu0
    %v1360 = vadd.f32 %v1319, %v1359
    %1361 = vmatmul.f32.gmra.mxu0 %v780
    %v1362 = vpop.f32.mrf.mxu0
    %v1363 = vadd.f32 %v1322, %v1362
    %1364 = vdwg.mxu0
    %v1365 = vadd.f32 %v1137, %v1140
    %v1366 = vadd.f32 %v1365, %v1143
    %v1367 = vadd.f32 %v1366, %v1146
    %v1368 = vadd.f32 %v1367, %v1149
    %v1369 = vadd.f32 %v1368, %v1152
    %v1370 = vadd.f32 %v1369, %v1155
    %v1371 = vadd.f32 %v1370, %v1158
    %v1372 = vrot.slane %v1371, 4
    %v1373 = vadd.f32 %v1371, %v1372
    %v1374 = vrot.slane %v1373, 2
    %v1375 = vadd.f32 %v1373, %v1374
    %v1376 = vrot.slane %v1375, 1
    %v1377 = vadd.f32 %v1375, %v1376
    %v1378 = vadd.f32 %v1342, %v1345
    %v1379 = vadd.f32 %v1378, %v1348
    %v1380 = vadd.f32 %v1379, %v1351
    %v1381 = vadd.f32 %v1380, %v1354
    %v1382 = vadd.f32 %v1381, %v1357
    %v1383 = vadd.f32 %v1382, %v1360
    %v1384 = vadd.f32 %v1383, %v1363
    %v1385 = vrot.slane %v1384, 4
    %v1386 = vadd.f32 %v1384, %v1385
    %v1387 = vrot.slane %v1386, 2
    %v1388 = vadd.f32 %v1386, %v1387
    %v1389 = vrot.slane %v1388, 1
    %v1390 = vadd.f32 %v1388, %v1389
    %v1391 = vmul.f32 %v1377, 0.015625
    %v1392 = vmul.f32 %v1390, 0.015625
    %v1393 = vsub.f32 %v1137, %v1391
    %v1394 = vsub.f32 %v1342, %v1392
    %v1395 = vsub.f32 %v1140, %v1391
    %v1396 = vsub.f32 %v1345, %v1392
    %v1397 = vsub.f32 %v1143, %v1391
    %v1398 = vsub.f32 %v1348, %v1392
    %v1399 = vsub.f32 %v1146, %v1391
    %v1400 = vsub.f32 %v1351, %v1392
    %v1401 = vsub.f32 %v1149, %v1391
    %v1402 = vsub.f32 %v1354, %v1392
    %v1403 = vsub.f32 %v1152, %v1391
    %v1404 = vsub.f32 %v1357, %v1392
    %v1405 = vsub.f32 %v1155, %v1391
    %v1406 = vsub.f32 %v1360, %v1392
    %v1407 = vsub.f32 %v1158, %v1391
    %v1408 = vsub.f32 %v1363, %v1392
    %v1409 = vmul.f32 %v1393, %v1393
    %v1410 = vmul.f32 %v1394, %v1394
    %v1411 = vmul.f32 %v1395, %v1395
    %v1412 = vmul.f32 %v1396, %v1396
    %v1413 = vmul.f32 %v1397, %v1397
    %v1414 = vmul.f32 %v1398, %v1398
    %v1415 = vmul.f32 %v1399, %v1399
    %v1416 = vmul.f32 %v1400, %v1400
    %v1417 = vmul.f32 %v1401, %v1401
    %v1418 = vmul.f32 %v1402, %v1402
    %v1419 = vmul.f32 %v1403, %v1403
    %v1420 = vmul.f32 %v1404, %v1404
    %v1421 = vmul.f32 %v1405, %v1405
    %v1422 = vmul.f32 %v1406, %v1406
    %v1423 = vmul.f32 %v1407, %v1407
    %v1424 = vmul.f32 %v1408, %v1408
    %v1425 = vadd.f32 %v1409, %v1411
    %v1426 = vadd.f32 %v1425, %v1413
    %v1427 = vadd.f32 %v1426, %v1415
    %v1428 = vadd.f32 %v1427, %v1417
    %v1429 = vadd.f32 %v1428, %v1419
    %v1430 = vadd.f32 %v1429, %v1421
    %v1431 = vadd.f32 %v1430, %v1423
    %v1432 = vrot.slane %v1431, 4
    %v1433 = vadd.f32 %v1431, %v1432
    %v1434 = vrot.slane %v1433, 2
    %v1435 = vadd.f32 %v1433, %v1434
    %v1436 = vrot.slane %v1435, 1
    %v1437 = vadd.f32 %v1435, %v1436
    %v1438 = vadd.f32 %v1410, %v1412
    %v1439 = vadd.f32 %v1438, %v1414
    %v1440 = vadd.f32 %v1439, %v1416
    %v1441 = vadd.f32 %v1440, %v1418
    %v1442 = vadd.f32 %v1441, %v1420
    %v1443 = vadd.f32 %v1442, %v1422
    %v1444 = vadd.f32 %v1443, %v1424
    %v1445 = vrot.slane %v1444, 4
    %v1446 = vadd.f32 %v1444, %v1445
    %v1447 = vrot.slane %v1446, 2
    %v1448 = vadd.f32 %v1446, %v1447
    %v1449 = vrot.slane %v1448, 1
    %v1450 = vadd.f32 %v1448, %v1449
    %v1451 = vmul.f32 %v1437, 0.015625
    %v1452 = vmul.f32 %v1450, 0.015625
    %v1453 = vld [vmem:[%s7] sm:$0x3]
    %v1454 = vadd.f32 %v1451, 1e-05
    %v1455 = vadd.f32 %v1452, 1e-05
    %v1456 = vrsqrt.pop %v1454
    %v1457 = vmul.f32 %v1456, %v1454
    %v1458 = vmul.f32 %v1457, %v1456
    %v1459 = vmul.f32 0.5, %v1458
    %v1460 = vsub.f32 1.5, %v1459
    %v1461 = vmul.f32 %v1456, %v1460
    %vm1462 = vweird.f32 %v1454
    %vm1463 = vweird.f32 %v1456
    %vm1464 = vmor %vm1462, %vm1463
    %v1465 = vsel %vm1464, %v1456, %v1461
    %v1466 = vrsqrt.pop %v1455
    %v1467 = vmul.f32 %v1466, %v1455
    %v1468 = vmul.f32 %v1467, %v1466
    %v1469 = vmul.f32 0.5, %v1468
    %v1470 = vsub.f32 1.5, %v1469
    %v1471 = vmul.f32 %v1466, %v1470
    %vm1472 = vweird.f32 %v1455
    %vm1473 = vweird.f32 %v1466
    %vm1474 = vmor %vm1472, %vm1473
    %v1475 = vsel %vm1474, %v1466, %v1471
    %v1478 = vrot.slane %v1475, 7
    %v1479 = vsel %vm382, %v1465, %v1478
    %v1481 = vmul.f32 %v1453, %v1479
    %v1483 = vperm.slane %v1481, 0
    %v1484 = vperm.slane %v1481, 1
    %v1487 = vmul.f32 %v1393, %v1483
    %v1488 = vmul.f32 %v1394, %v1484
    %v1489 = vmul.f32 %v1395, %v1483
    %v1490 = vmul.f32 %v1396, %v1484
    %v1491 = vmul.f32 %v1397, %v1483
    %v1492 = vmul.f32 %v1398, %v1484
    %v1493 = vmul.f32 %v1399, %v1483
    %v1494 = vmul.f32 %v1400, %v1484
    %v1495 = vmul.f32 %v1401, %v1483
    %v1496 = vmul.f32 %v1402, %v1484
    %v1497 = vmul.f32 %v1403, %v1483
    %v1498 = vmul.f32 %v1404, %v1484
    %v1499 = vmul.f32 %v1405, %v1483
    %v1500 = vmul.f32 %v1406, %v1484
    %v1501 = vmul.f32 %v1407, %v1483
    %v1502 = vmul.f32 %v1408, %v1484
    %v1503 = vld [vmem:[%s8] sm:$0x3]
    %v1505 = vperm.slane %v1503, 0
    %v1506 = vperm.slane %v1503, 1
    %v1509 = vadd.f32 %v1487, %v1505
    %v1510 = vadd.f32 %v1488, %v1506
    %v1511 = vadd.f32 %v1489, %v1505
    %v1512 = vadd.f32 %v1490, %v1506
    %v1513 = vadd.f32 %v1491, %v1505
    %v1514 = vadd.f32 %v1492, %v1506
    %v1515 = vadd.f32 %v1493, %v1505
    %v1516 = vadd.f32 %v1494, %v1506
    %v1517 = vadd.f32 %v1495, %v1505
    %v1518 = vadd.f32 %v1496, %v1506
    %v1519 = vadd.f32 %v1497, %v1505
    %v1520 = vadd.f32 %v1498, %v1506
    %v1521 = vadd.f32 %v1499, %v1505
    %v1522 = vadd.f32 %v1500, %v1506
    %v1523 = vadd.f32 %v1501, %v1505
    %v1524 = vadd.f32 %v1502, %v1506
    %v1525 = vmax.f32 %v1509, 0.0
    %v1526 = vmax.f32 %v1510, 0.0
    %v1527 = vmax.f32 %v1511, 0.0
    %v1528 = vmax.f32 %v1512, 0.0
    %v1529 = vmax.f32 %v1513, 0.0
    %v1530 = vmax.f32 %v1514, 0.0
    %v1531 = vmax.f32 %v1515, 0.0
    %v1532 = vmax.f32 %v1516, 0.0
    %v1533 = vmax.f32 %v1517, 0.0
    %v1534 = vmax.f32 %v1518, 0.0
    %v1535 = vmax.f32 %v1519, 0.0
    %v1536 = vmax.f32 %v1520, 0.0
    %v1537 = vmax.f32 %v1521, 0.0
    %v1538 = vmax.f32 %v1522, 0.0
    %v1539 = vmax.f32 %v1523, 0.0
    %v1540 = vmax.f32 %v1524, 0.0
    %v1557 = vrot.slane %v1525, 7
    %v1558 = vrot.slane %v1526, 7
    %v1559 = vrot.slane %v1527, 7
    %v1560 = vsel %vm382, %v1557, %v1559
    %v1561 = vrot.slane %v1528, 7
    %v1562 = vsel %vm382, %v1558, %v1561
    %v1563 = vrot.slane %v1529, 7
    %v1564 = vsel %vm382, %v1559, %v1563
    %v1565 = vrot.slane %v1530, 7
    %v1566 = vsel %vm382, %v1561, %v1565
    %v1567 = vrot.slane %v1531, 7
    %v1568 = vsel %vm382, %v1563, %v1567
    %v1569 = vrot.slane %v1532, 7
    %v1570 = vsel %vm382, %v1565, %v1569
    %v1571 = vrot.slane %v1533, 7
    %v1572 = vrot.slane %v1534, 7
    %v1573 = vrot.slane %v1535, 7
    %v1574 = vsel %vm382, %v1571, %v1573
    %v1575 = vrot.slane %v1536, 7
    %v1576 = vsel %vm382, %v1572, %v1575
    %v1577 = vrot.slane %v1537, 7
    %v1578 = vsel %vm382, %v1573, %v1577
    %v1579 = vrot.slane %v1538, 7
    %v1580 = vsel %vm382, %v1575, %v1579
    %v1581 = vrot.slane %v1539, 7
    %v1582 = vsel %vm382, %v1577, %v1581
    %v1583 = vrot.slane %v1540, 7
    %v1584 = vsel %vm382, %v1579, %v1583
    %1605 = vst [vmem:[#allocation4] sm:$0xfe] %v1557
    %1606 = vst [vmem:[#allocation4 + $0x8] sm:$0xfe] %v1558
    %1607 = vst [vmem:[#allocation4 + $0x10] sm:$0xff] %v1560
    %1608 = vst [vmem:[#allocation4 + $0x18] sm:$0xff] %v1562
    %1609 = vst [vmem:[#allocation4 + $0x20] sm:$0xff] %v1564
    %1610 = vst [vmem:[#allocation4 + $0x28] sm:$0xff] %v1566
    %1611 = vst [vmem:[#allocation4 + $0x30] sm:$0xff] %v1568
    %1612 = vst [vmem:[#allocation4 + $0x38] sm:$0xff] %v1570
    %1613 = vst [vmem:[#allocation4 + $0x40] sm:$0x1] %v1567
    %1614 = vst [vmem:[#allocation4 + $0x48] sm:$0x1] %v1569
    %1615 = vst [vmem:[#allocation4 + $0x50] sm:$0xfe] %v1571
    %1616 = vst [vmem:[#allocation4 + $0x58] sm:$0xfe] %v1572
    %1617 = vst [vmem:[#allocation4 + $0x60] sm:$0xff] %v1574
    %1618 = vst [vmem:[#allocation4 + $0x68] sm:$0xff] %v1576
    %1619 = vst [vmem:[#allocation4 + $0x70] sm:$0xff] %v1578
    %1620 = vst [vmem:[#allocation4 + $0x78] sm:$0xff] %v1580
    %1621 = vst [vmem:[#allocation4 + $0x80] sm:$0xff] %v1582
    %1622 = vst [vmem:[#allocation4 + $0x88] sm:$0xff] %v1584
    %1623 = vst [vmem:[#allocation4 + $0x90] sm:$0x1] %v1581
    %1624 = vst [vmem:[#allocation4 + $0x98] sm:$0x1] %v1583
    %1625 = vst [vmem:[#allocation1] sm:$0xff] %v1525
    %1626 = vst [vmem:[#allocation1 + $0x9] sm:$0xff] %v1526
    %s1627 = scalar_lea.vmem [#allocation1], 1
    %v1628 = vld [vmem:[%s1627] ss:$9 sm:$0xff]
    %1629 = vst [vmem:[#allocation1] sm:$0xff] %v1533
    %1630 = vst [vmem:[#allocation1 + $0x9] sm:$0xff] %v1534
    %v1631 = vld [vmem:[%s1627] ss:$9 sm:$0xff]
    %v1634 = vlaneseq
    %vm1635 = vcmp.ge.s32.totalorder %v1634, 0
    %vm1636 = vcmp.lt.s32.totalorder %v1634, 256
    %vm1637 = vmand %vm1635, %vm1636
    %1638 = vst.msk [vmem:[#allocation4] ss:$8 sm:$0x3] %vm1637, %v1628
    %1639 = vst.msk [vmem:[#allocation4] ss:$8 sm:$0x0] %vm1637, %v1628
    %s1640 = scalar_lea.vmem [#allocation4], 80
    %1641 = vst.msk [vmem:[%s1640] ss:$8 sm:$0x3] %vm1637, %v1631
    %1642 = vst.msk [vmem:[%s1640] ss:$8 sm:$0x0] %vm1637, %v1631
    %1643 = vst [vmem:[#allocation1] sm:$0xff] %v1531
    %1644 = vst [vmem:[#allocation1 + $0x9] sm:$0xff] %v1532
    %s1645 = scalar_lea.vmem [#allocation1], 6
    %v1646 = vld [vmem:[%s1645] ss:$9 sm:$0xff]
    %1647 = vst [vmem:[#allocation1] sm:$0xff] %v1539
    %1648 = vst [vmem:[#allocation1 + $0x9] sm:$0xff] %v1540
    %v1649 = vld [vmem:[%s1645] ss:$9 sm:$0xff]
    %s1652 = scalar_lea.vmem [#allocation4], 65
    %1653 = vst.msk [vmem:[%s1652] ss:$8 sm:$0x3] %vm1637, %v1646
    %1654 = vst.msk [vmem:[%s1652] ss:$8 sm:$0x0] %vm1637, %v1646
    %s1655 = scalar_lea.vmem [#allocation4], 145
    %1656 = vst.msk [vmem:[%s1655] ss:$8 sm:$0x3] %vm1637, %v1649
    %1657 = vst.msk [vmem:[%s1655] ss:$8 sm:$0x0] %vm1637, %v1649
    %v1658 = vld [vmem:[#allocation4] sm:$0xff]
    %v1659 = vld [vmem:[#allocation4 + $0x8] sm:$0xff]
    %v1660 = vld [vmem:[#allocation4 + $0x10] sm:$0xff]
    %v1661 = vld [vmem:[#allocation4 + $0x18] sm:$0xff]
    %v1662 = vld [vmem:[#allocation4 + $0x20] sm:$0xff]
    %v1663 = vld [vmem:[#allocation4 + $0x28] sm:$0xff]
    %v1664 = vld [vmem:[#allocation4 + $0x30] sm:$0xff]
    %v1665 = vld [vmem:[#allocation4 + $0x38] sm:$0xff]
    %v1666 = vld [vmem:[#allocation4 + $0x40] sm:$0x3]
    %v1667 = vld [vmem:[#allocation4 + $0x48] sm:$0x3]
    %v1668 = vld [vmem:[#allocation4 + $0x50] sm:$0xff]
    %v1669 = vld [vmem:[#allocation4 + $0x58] sm:$0xff]
    %v1670 = vld [vmem:[#allocation4 + $0x60] sm:$0xff]
    %v1671 = vld [vmem:[#allocation4 + $0x68] sm:$0xff]
    %v1672 = vld [vmem:[#allocation4 + $0x70] sm:$0xff]
    %v1673 = vld [vmem:[#allocation4 + $0x78] sm:$0xff]
    %v1674 = vld [vmem:[#allocation4 + $0x80] sm:$0xff]
    %v1675 = vld [vmem:[#allocation4 + $0x88] sm:$0xff]
    %v1676 = vld [vmem:[#allocation4 + $0x90] sm:$0x3]
    %v1677 = vld [vmem:[#allocation4 + $0x98] sm:$0x3]
    %v1698 = vrot.slane %v1658, 1
    %v1699 = vrot.slane %v1660, 1
    %v1700 = vsel %vm124, %v1698, %v1699
    %v1701 = vrot.slane %v1659, 1
    %v1702 = vrot.slane %v1661, 1
    %v1703 = vsel %vm124, %v1701, %v1702
    %v1704 = vrot.slane %v1662, 1
    %v1705 = vsel %vm124, %v1699, %v1704
    %v1706 = vrot.slane %v1663, 1
    %v1707 = vsel %vm124, %v1702, %v1706
    %v1708 = vrot.slane %v1664, 1
    %v1709 = vsel %vm124, %v1704, %v1708
    %v1710 = vrot.slane %v1665, 1
    %v1711 = vsel %vm124, %v1706, %v1710
    %v1712 = vrot.slane %v1666, 1
    %v1713 = vsel %vm124, %v1708, %v1712
    %v1714 = vrot.slane %v1667, 1
    %v1715 = vsel %vm124, %v1710, %v1714
    %v1716 = vrot.slane %v1668, 1
    %v1717 = vrot.slane %v1670, 1
    %v1718 = vsel %vm124, %v1716, %v1717
    %v1719 = vrot.slane %v1669, 1
    %v1720 = vrot.slane %v1671, 1
    %v1721 = vsel %vm124, %v1719, %v1720
    %v1722 = vrot.slane %v1672, 1
    %v1723 = vsel %vm124, %v1717, %v1722
    %v1724 = vrot.slane %v1673, 1
    %v1725 = vsel %vm124, %v1720, %v1724
    %v1726 = vrot.slane %v1674, 1
    %v1727 = vsel %vm124, %v1722, %v1726
    %v1728 = vrot.slane %v1675, 1
    %v1729 = vsel %vm124, %v1724, %v1728
    %v1730 = vrot.slane %v1676, 1
    %v1731 = vsel %vm124, %v1726, %v1730
    %v1732 = vrot.slane %v1677, 1
    %v1733 = vsel %vm124, %v1728, %v1732
    %v1750 = vrot.slane %v1658, 2
    %v1751 = vrot.slane %v1660, 2
    %v1752 = vsel %vm167, %v1750, %v1751
    %v1753 = vrot.slane %v1659, 2
    %v1754 = vrot.slane %v1661, 2
    %v1755 = vsel %vm167, %v1753, %v1754
    %v1756 = vrot.slane %v1662, 2
    %v1757 = vsel %vm167, %v1751, %v1756
    %v1758 = vrot.slane %v1663, 2
    %v1759 = vsel %vm167, %v1754, %v1758
    %v1760 = vrot.slane %v1664, 2
    %v1761 = vsel %vm167, %v1756, %v1760
    %v1762 = vrot.slane %v1665, 2
    %v1763 = vsel %vm167, %v1758, %v1762
    %v1764 = vrot.slane %v1666, 2
    %v1765 = vsel %vm167, %v1760, %v1764
    %v1766 = vrot.slane %v1667, 2
    %v1767 = vsel %vm167, %v1762, %v1766
    %v1768 = vrot.slane %v1668, 2
    %v1769 = vrot.slane %v1670, 2
    %v1770 = vsel %vm167, %v1768, %v1769
    %v1771 = vrot.slane %v1669, 2
    %v1772 = vrot.slane %v1671, 2
    %v1773 = vsel %vm167, %v1771, %v1772
    %v1774 = vrot.slane %v1672, 2
    %v1775 = vsel %vm167, %v1769, %v1774
    %v1776 = vrot.slane %v1673, 2
    %v1777 = vsel %vm167, %v1772, %v1776
    %v1778 = vrot.slane %v1674, 2
    %v1779 = vsel %vm167, %v1774, %v1778
    %v1780 = vrot.slane %v1675, 2
    %v1781 = vsel %vm167, %v1776, %v1780
    %v1782 = vrot.slane %v1676, 2
    %v1783 = vsel %vm167, %v1778, %v1782
    %v1784 = vrot.slane %v1677, 2
    %v1785 = vsel %vm167, %v1780, %v1784
    %v1802 = vld [vmem:[%s9] sm:$0xff]
    %v1803 = vld [vmem:[%s9 + $0x8] sm:$0xff]
    %v1804 = vld [vmem:[%s9 + $0x10] sm:$0xff]
    %v1805 = vld [vmem:[%s9 + $0x18] sm:$0xff]
    %v1806 = vld [vmem:[%s9 + $0x20] sm:$0xff]
    %v1807 = vld [vmem:[%s9 + $0x28] sm:$0xff]
    %v1808 = vld [vmem:[%s9 + $0x30] sm:$0xff]
    %v1809 = vld [vmem:[%s9 + $0x38] sm:$0xff]
    %v1810 = vld [vmem:[%s9 + $0x40] sm:$0xff]
    %v1811 = vld [vmem:[%s9 + $0x48] sm:$0xff]
    %v1812 = vld [vmem:[%s9 + $0x50] sm:$0xff]
    %v1813 = vld [vmem:[%s9 + $0x58] sm:$0xff]
    %v1814 = vld [vmem:[%s9 + $0x60] sm:$0xff]
    %v1815 = vld [vmem:[%s9 + $0x68] sm:$0xff]
    %v1816 = vld [vmem:[%s9 + $0x70] sm:$0xff]
    %v1817 = vld [vmem:[%s9 + $0x78] sm:$0xff]
    %v1818 = vld [vmem:[%s9 + $0x80] sm:$0xff]
    %v1819 = vld [vmem:[%s9 + $0x88] sm:$0xff]
    %v1820 = vld [vmem:[%s9 + $0x90] sm:$0xff]
    %v1821 = vld [vmem:[%s9 + $0x98] sm:$0xff]
    %v1822 = vld [vmem:[%s9 + $0xa0] sm:$0xff]
    %v1823 = vld [vmem:[%s9 + $0xa8] sm:$0xff]
    %v1824 = vld [vmem:[%s9 + $0xb0] sm:$0xff]
    %v1825 = vld [vmem:[%s9 + $0xb8] sm:$0xff]
    %v1826 = vld [vmem:[%s9 + $0xc0] sm:$0xff]
    %v1827 = vld [vmem:[%s9 + $0xc8] sm:$0xff]
    %v1828 = vld [vmem:[%s9 + $0xd0] sm:$0xff]
    %v1829 = vld [vmem:[%s9 + $0xd8] sm:$0xff]
    %v1830 = vld [vmem:[%s9 + $0xe0] sm:$0xff]
    %v1831 = vld [vmem:[%s9 + $0xe8] sm:$0xff]
    %v1832 = vld [vmem:[%s9 + $0xf0] sm:$0xff]
    %v1833 = vld [vmem:[%s9 + $0xf8] sm:$0xff]
    %v1834 = vld [vmem:[%s9 + $0x100] sm:$0xff]
    %v1835 = vld [vmem:[%s9 + $0x108] sm:$0xff]
    %v1836 = vld [vmem:[%s9 + $0x110] sm:$0xff]
    %v1837 = vld [vmem:[%s9 + $0x118] sm:$0xff]
    %v1838 = vld [vmem:[%s9 + $0x120] sm:$0xff]
    %v1839 = vld [vmem:[%s9 + $0x128] sm:$0xff]
    %v1840 = vld [vmem:[%s9 + $0x130] sm:$0xff]
    %v1841 = vld [vmem:[%s9 + $0x138] sm:$0xff]
    %v1842 = vld [vmem:[%s9 + $0x140] sm:$0xff]
    %v1843 = vld [vmem:[%s9 + $0x148] sm:$0xff]
    %v1844 = vld [vmem:[%s9 + $0x150] sm:$0xff]
    %v1845 = vld [vmem:[%s9 + $0x158] sm:$0xff]
    %v1846 = vld [vmem:[%s9 + $0x160] sm:$0xff]
    %v1847 = vld [vmem:[%s9 + $0x168] sm:$0xff]
    %v1848 = vld [vmem:[%s9 + $0x170] sm:$0xff]
    %v1849 = vld [vmem:[%s9 + $0x178] sm:$0xff]
    %v1850 = vld [vmem:[%s9 + $0x180] sm:$0xff]
    %v1851 = vld [vmem:[%s9 + $0x188] sm:$0xff]
    %v1852 = vld [vmem:[%s9 + $0x190] sm:$0xff]
    %v1853 = vld [vmem:[%s9 + $0x198] sm:$0xff]
    %v1854 = vld [vmem:[%s9 + $0x1a0] sm:$0xff]
    %v1855 = vld [vmem:[%s9 + $0x1a8] sm:$0xff]
    %v1856 = vld [vmem:[%s9 + $0x1b0] sm:$0xff]
    %v1857 = vld [vmem:[%s9 + $0x1b8] sm:$0xff]
    %v1858 = vld [vmem:[%s9 + $0x1c0] sm:$0xff]
    %v1859 = vld [vmem:[%s9 + $0x1c8] sm:$0xff]
    %v1860 = vld [vmem:[%s9 + $0x1d0] sm:$0xff]
    %v1861 = vld [vmem:[%s9 + $0x1d8] sm:$0xff]
    %v1862 = vld [vmem:[%s9 + $0x1e0] sm:$0xff]
    %v1863 = vld [vmem:[%s9 + $0x1e8] sm:$0xff]
    %v1864 = vld [vmem:[%s9 + $0x1f0] sm:$0xff]
    %v1865 = vld [vmem:[%s9 + $0x1f8] sm:$0xff]
    %v1866 = vld [vmem:[%s9 + $0x200] sm:$0xff]
    %v1867 = vld [vmem:[%s9 + $0x208] sm:$0xff]
    %v1868 = vld [vmem:[%s9 + $0x210] sm:$0xff]
    %v1869 = vld [vmem:[%s9 + $0x218] sm:$0xff]
    %v1870 = vld [vmem:[%s9 + $0x220] sm:$0xff]
    %v1871 = vld [vmem:[%s9 + $0x228] sm:$0xff]
    %v1872 = vld [vmem:[%s9 + $0x230] sm:$0xff]
    %v1873 = vld [vmem:[%s9 + $0x238] sm:$0xff]
    %v1874 = vld [vmem:[%s9 + $0x240] sm:$0xff]
    %v1875 = vld [vmem:[%s9 + $0x248] sm:$0xff]
    %v1876 = vld [vmem:[%s9 + $0x250] sm:$0xff]
    %v1877 = vld [vmem:[%s9 + $0x258] sm:$0xff]
    %v1878 = vld [vmem:[%s9 + $0x260] sm:$0xff]
    %v1879 = vld [vmem:[%s9 + $0x268] sm:$0xff]
    %v1880 = vld [vmem:[%s9 + $0x270] sm:$0xff]
    %v1881 = vld [vmem:[%s9 + $0x278] sm:$0xff]
    %v1882 = vld [vmem:[%s9 + $0x280] sm:$0xff]
    %v1883 = vld [vmem:[%s9 + $0x288] sm:$0xff]
    %v1884 = vld [vmem:[%s9 + $0x290] sm:$0xff]
    %v1885 = vld [vmem:[%s9 + $0x298] sm:$0xff]
    %v1886 = vld [vmem:[%s9 + $0x2a0] sm:$0xff]
    %v1887 = vld [vmem:[%s9 + $0x2a8] sm:$0xff]
    %v1888 = vld [vmem:[%s9 + $0x2b0] sm:$0xff]
    %v1889 = vld [vmem:[%s9 + $0x2b8] sm:$0xff]
    %v1890 = vld [vmem:[%s9 + $0x2c0] sm:$0xff]
    %v1891 = vld [vmem:[%s9 + $0x2c8] sm:$0xff]
    %v1892 = vld [vmem:[%s9 + $0x2d0] sm:$0xff]
    %v1893 = vld [vmem:[%s9 + $0x2d8] sm:$0xff]
    %v1894 = vld [vmem:[%s9 + $0x2e0] sm:$0xff]
    %v1895 = vld [vmem:[%s9 + $0x2e8] sm:$0xff]
    %v1896 = vld [vmem:[%s9 + $0x2f0] sm:$0xff]
    %v1897 = vld [vmem:[%s9 + $0x2f8] sm:$0xff]
    %v1898 = vld [vmem:[%s10] sm:$0x1]
    %v1900 = vperm.slane %v1898, 0
    %1902 = vmatpush.msra.mxu0 %v1817
    %1903 = vmatpush.msra.mxu0 %v1816
    %1904 = vmatpush.msra.mxu0 %v1815
    %1905 = vmatpush.msra.mxu0 %v1814
    %1906 = vmatpush.msra.mxu0 %v1813
    %1907 = vmatpush.msra.mxu0 %v1812
    %1908 = vmatpush.msra.mxu0 %v1811
    %1909 = vmatpush.msra.mxu0 %v1810
    %1910 = vmatpush.msra.mxu0 %v1809
    %1911 = vmatpush.msra.mxu0 %v1808
    %1912 = vmatpush.msra.mxu0 %v1807
    %1913 = vmatpush.msra.mxu0 %v1806
    %1914 = vmatpush.msra.mxu0 %v1805
    %1915 = vmatpush.msra.mxu0 %v1804
    %1916 = vmatpush.msra.mxu0 %v1803
    %1917 = vmatpush.msra.mxu0 %v1802
    %1918 = vmatmul.f32.gmra.mxu0 %v1658
    %v1919 = vpop.f32.mrf.mxu0
    %v1920 = vadd.f32 %v1900, %v1919
    %1921 = vmatmul.f32.gmra.mxu0 %v1660
    %v1922 = vpop.f32.mrf.mxu0
    %v1923 = vadd.f32 %v1900, %v1922
    %1924 = vmatmul.f32.gmra.mxu0 %v1662
    %v1925 = vpop.f32.mrf.mxu0
    %v1926 = vadd.f32 %v1900, %v1925
    %1927 = vmatmul.f32.gmra.mxu0 %v1664
    %v1928 = vpop.f32.mrf.mxu0
    %v1929 = vadd.f32 %v1900, %v1928
    %1930 = vmatmul.f32.gmra.mxu0 %v1668
    %v1931 = vpop.f32.mrf.mxu0
    %v1932 = vadd.f32 %v1900, %v1931
    %1933 = vmatmul.f32.gmra.mxu0 %v1670
    %v1934 = vpop.f32.mrf.mxu0
    %v1935 = vadd.f32 %v1900, %v1934
    %1936 = vmatmul.f32.gmra.mxu0 %v1672
    %v1937 = vpop.f32.mrf.mxu0
    %v1938 = vadd.f32 %v1900, %v1937
    %1939 = vmatmul.f32.gmra.mxu0 %v1674
    %v1940 = vpop.f32.mrf.mxu0
    %v1941 = vadd.f32 %v1900, %v1940
    %1942 = vdwg.mxu0
    %1943 = vmatpush.msra.mxu0 %v1833
    %1944 = vmatpush.msra.mxu0 %v1832
    %1945 = vmatpush.msra.mxu0 %v1831
    %1946 = vmatpush.msra.mxu0 %v1830
    %1947 = vmatpush.msra.mxu0 %v1829
    %1948 = vmatpush.msra.mxu0 %v1828
    %1949 = vmatpush.msra.mxu0 %v1827
    %1950 = vmatpush.msra.mxu0 %v1826
    %1951 = vmatpush.msra.mxu0 %v1825
    %1952 = vmatpush.msra.mxu0 %v1824
    %1953 = vmatpush.msra.mxu0 %v1823
    %1954 = vmatpush.msra.mxu0 %v1822
    %1955 = vmatpush.msra.mxu0 %v1821
    %1956 = vmatpush.msra.mxu0 %v1820
    %1957 = vmatpush.msra.mxu0 %v1819
    %1958 = vmatpush.msra.mxu0 %v1818
    %1959 = vmatmul.f32.gmra.mxu0 %v1659
    %v1960 = vpop.f32.mrf.mxu0
    %v1961 = vadd.f32 %v1920, %v1960
    %1962 = vmatmul.f32.gmra.mxu0 %v1661
    %v1963 = vpop.f32.mrf.mxu0
    %v1964 = vadd.f32 %v1923, %v1963
    %1965 = vmatmul.f32.gmra.mxu0 %v1663
    %v1966 = vpop.f32.mrf.mxu0
    %v1967 = vadd.f32 %v1926, %v1966
    %1968 = vmatmul.f32.gmra.mxu0 %v1665
    %v1969 = vpop.f32.mrf.mxu0
    %v1970 = vadd.f32 %v1929, %v1969
    %1971 = vmatmul.f32.gmra.mxu0 %v1669
    %v1972 = vpop.f32.mrf.mxu0
    %v1973 = vadd.f32 %v1932, %v1972
    %1974 = vmatmul.f32.gmra.mxu0 %v1671
    %v1975 = vpop.f32.mrf.mxu0
    %v1976 = vadd.f32 %v1935, %v1975
    %1977 = vmatmul.f32.gmra.mxu0 %v1673
    %v1978 = vpop.f32.mrf.mxu0
    %v1979 = vadd.f32 %v1938, %v1978
    %1980 = vmatmul.f32.gmra.mxu0 %v1675
    %v1981 = vpop.f32.mrf.mxu0
    %v1982 = vadd.f32 %v1941, %v1981
    %1983 = vdwg.mxu0
    %1984 = vmatpush.msra.mxu0 %v1849
    %1985 = vmatpush.msra.mxu0 %v1848
    %1986 = vmatpush.msra.mxu0 %v1847
    %1987 = vmatpush.msra.mxu0 %v1846
    %1988 = vmatpush.msra.mxu0 %v1845
    %1989 = vmatpush.msra.mxu0 %v1844
    %1990 = vmatpush.msra.mxu0 %v1843
    %1991 = vmatpush.msra.mxu0 %v1842
    %1992 = vmatpush.msra.mxu0 %v1841
    %1993 = vmatpush.msra.mxu0 %v1840
    %1994 = vmatpush.msra.mxu0 %v1839
    %1995 = vmatpush.msra.mxu0 %v1838
    %1996 = vmatpush.msra.mxu0 %v1837
    %1997 = vmatpush.msra.mxu0 %v1836
    %1998 = vmatpush.msra.mxu0 %v1835
    %1999 = vmatpush.msra.mxu0 %v1834
    %2000 = vmatmul.f32.gmra.mxu0 %v1700
    %v2001 = vpop.f32.mrf.mxu0
    %v2002 = vadd.f32 %v1961, %v2001
    %2003 = vmatmul.f32.gmra.mxu0 %v1705
    %v2004 = vpop.f32.mrf.mxu0
    %v2005 = vadd.f32 %v1964, %v2004
    %2006 = vmatmul.f32.gmra.mxu0 %v1709
    %v2007 = vpop.f32.mrf.mxu0
    %v2008 = vadd.f32 %v1967, %v2007
    %2009 = vmatmul.f32.gmra.mxu0 %v1713
    %v2010 = vpop.f32.mrf.mxu0
    %v2011 = vadd.f32 %v1970, %v2010
    %2012 = vmatmul.f32.gmra.mxu0 %v1718
    %v2013 = vpop.f32.mrf.mxu0
    %v2014 = vadd.f32 %v1973, %v2013
    %2015 = vmatmul.f32.gmra.mxu0 %v1723
    %v2016 = vpop.f32.mrf.mxu0
    %v2017 = vadd.f32 %v1976, %v2016
    %2018 = vmatmul.f32.gmra.mxu0 %v1727
    %v2019 = vpop.f32.mrf.mxu0
    %v2020 = vadd.f32 %v1979, %v2019
    %2021 = vmatmul.f32.gmra.mxu0 %v1731
    %v2022 = vpop.f32.mrf.mxu0
    %v2023 = vadd.f32 %v1982, %v2022
    %2024 = vdwg.mxu0
    %2025 = vmatpush.msra.mxu0 %v1865
    %2026 = vmatpush.msra.mxu0 %v1864
    %2027 = vmatpush.msra.mxu0 %v1863
    %2028 = vmatpush.msra.mxu0 %v1862
    %2029 = vmatpush.msra.mxu0 %v1861
    %2030 = vmatpush.msra.mxu0 %v1860
    %2031 = vmatpush.msra.mxu0 %v1859
    %2032 = vmatpush.msra.mxu0 %v1858
    %2033 = vmatpush.msra.mxu0 %v1857
    %2034 = vmatpush.msra.mxu0 %v1856
    %2035 = vmatpush.msra.mxu0 %v1855
    %2036 = vmatpush.msra.mxu0 %v1854
    %2037 = vmatpush.msra.mxu0 %v1853
    %2038 = vmatpush.msra.mxu0 %v1852
    %2039 = vmatpush.msra.mxu0 %v1851
    %2040 = vmatpush.msra.mxu0 %v1850
    %2041 = vmatmul.f32.gmra.mxu0 %v1703
    %v2042 = vpop.f32.mrf.mxu0
    %v2043 = vadd.f32 %v2002, %v2042
    %2044 = vmatmul.f32.gmra.mxu0 %v1707
    %v2045 = vpop.f32.mrf.mxu0
    %v2046 = vadd.f32 %v2005, %v2045
    %2047 = vmatmul.f32.gmra.mxu0 %v1711
    %v2048 = vpop.f32.mrf.mxu0
    %v2049 = vadd.f32 %v2008, %v2048
    %2050 = vmatmul.f32.gmra.mxu0 %v1715
    %v2051 = vpop.f32.mrf.mxu0
    %v2052 = vadd.f32 %v2011, %v2051
    %2053 = vmatmul.f32.gmra.mxu0 %v1721
    %v2054 = vpop.f32.mrf.mxu0
    %v2055 = vadd.f32 %v2014, %v2054
    %2056 = vmatmul.f32.gmra.mxu0 %v1725
    %v2057 = vpop.f32.mrf.mxu0
    %v2058 = vadd.f32 %v2017, %v2057
    %2059 = vmatmul.f32.gmra.mxu0 %v1729
    %v2060 = vpop.f32.mrf.mxu0
    %v2061 = vadd.f32 %v2020, %v2060
    %2062 = vmatmul.f32.gmra.mxu0 %v1733
    %v2063 = vpop.f32.mrf.mxu0
    %v2064 = vadd.f32 %v2023, %v2063
    %2065 = vdwg.mxu0
    %2066 = vmatpush.msra.mxu0 %v1881
    %2067 = vmatpush.msra.mxu0 %v1880
    %2068 = vmatpush.msra.mxu0 %v1879
    %2069 = vmatpush.msra.mxu0 %v1878
    %2070 = vmatpush.msra.mxu0 %v1877
    %2071 = vmatpush.msra.mxu0 %v1876
    %2072 = vmatpush.msra.mxu0 %v1875
    %2073 = vmatpush.msra.mxu0 %v1874
    %2074 = vmatpush.msra.mxu0 %v1873
    %2075 = vmatpush.msra.mxu0 %v1872
    %2076 = vmatpush.msra.mxu0 %v1871
    %2077 = vmatpush.msra.mxu0 %v1870
    %2078 = vmatpush.msra.mxu0 %v1869
    %2079 = vmatpush.msra.mxu0 %v1868
    %2080 = vmatpush.msra.mxu0 %v1867
    %2081 = vmatpush.msra.mxu0 %v1866
    %2082 = vmatmul.f32.gmra.mxu0 %v1752
    %v2083 = vpop.f32.mrf.mxu0
    %v2084 = vadd.f32 %v2043, %v2083
    %2085 = vmatmul.f32.gmra.mxu0 %v1757
    %v2086 = vpop.f32.mrf.mxu0
    %v2087 = vadd.f32 %v2046, %v2086
    %2088 = vmatmul.f32.gmra.mxu0 %v1761
    %v2089 = vpop.f32.mrf.mxu0
    %v2090 = vadd.f32 %v2049, %v2089
    %2091 = vmatmul.f32.gmra.mxu0 %v1765
    %v2092 = vpop.f32.mrf.mxu0
    %v2093 = vadd.f32 %v2052, %v2092
    %2094 = vmatmul.f32.gmra.mxu0 %v1770
    %v2095 = vpop.f32.mrf.mxu0
    %v2096 = vadd.f32 %v2055, %v2095
    %2097 = vmatmul.f32.gmra.mxu0 %v1775
    %v2098 = vpop.f32.mrf.mxu0
    %v2099 = vadd.f32 %v2058, %v2098
    %2100 = vmatmul.f32.gmra.mxu0 %v1779
    %v2101 = vpop.f32.mrf.mxu0
    %v2102 = vadd.f32 %v2061, %v2101
    %2103 = vmatmul.f32.gmra.mxu0 %v1783
    %v2104 = vpop.f32.mrf.mxu0
    %v2105 = vadd.f32 %v2064, %v2104
    %2106 = vdwg.mxu0
    %2107 = vmatpush.msra.mxu0 %v1897
    %2108 = vmatpush.msra.mxu0 %v1896
    %2109 = vmatpush.msra.mxu0 %v1895
    %2110 = vmatpush.msra.mxu0 %v1894
    %2111 = vmatpush.msra.mxu0 %v1893
    %2112 = vmatpush.msra.mxu0 %v1892
    %2113 = vmatpush.msra.mxu0 %v1891
    %2114 = vmatpush.msra.mxu0 %v1890
    %2115 = vmatpush.msra.mxu0 %v1889
    %2116 = vmatpush.msra.mxu0 %v1888
    %2117 = vmatpush.msra.mxu0 %v1887
    %2118 = vmatpush.msra.mxu0 %v1886
    %2119 = vmatpush.msra.mxu0 %v1885
    %2120 = vmatpush.msra.mxu0 %v1884
    %2121 = vmatpush.msra.mxu0 %v1883
    %2122 = vmatpush.msra.mxu0 %v1882
    %2123 = vmatmul.f32.gmra.mxu0 %v1755
    %v2124 = vpop.f32.mrf.mxu0
    %v2125 = vadd.f32 %v2084, %v2124
    %2126 = vmatmul.f32.gmra.mxu0 %v1759
    %v2127 = vpop.f32.mrf.mxu0
    %v2128 = vadd.f32 %v2087, %v2127
    %2129 = vmatmul.f32.gmra.mxu0 %v1763
    %v2130 = vpop.f32.mrf.mxu0
    %v2131 = vadd.f32 %v2090, %v2130
    %2132 = vmatmul.f32.gmra.mxu0 %v1767
    %v2133 = vpop.f32.mrf.mxu0
    %v2134 = vadd.f32 %v2093, %v2133
    %2135 = vmatmul.f32.gmra.mxu0 %v1773
    %v2136 = vpop.f32.mrf.mxu0
    %v2137 = vadd.f32 %v2096, %v2136
    %2138 = vmatmul.f32.gmra.mxu0 %v1777
    %v2139 = vpop.f32.mrf.mxu0
    %v2140 = vadd.f32 %v2099, %v2139
    %2141 = vmatmul.f32.gmra.mxu0 %v1781
    %v2142 = vpop.f32.mrf.mxu0
    %v2143 = vadd.f32 %v2102, %v2142
    %2144 = vmatmul.f32.gmra.mxu0 %v1785
    %v2145 = vpop.f32.mrf.mxu0
    %v2146 = vadd.f32 %v2105, %v2145
    %2147 = vdwg.mxu0
    %v2148 = vsel %vm433, %v2125, 0.0
    %v2149 = vsel %vm433, %v2128, 0.0
    %v2150 = vadd.f32 %v2148, %v2149
    %v2151 = vsel %vm433, %v2131, 0.0
    %v2152 = vadd.f32 %v2150, %v2151
    %v2153 = vsel %vm433, %v2134, 0.0
    %v2154 = vadd.f32 %v2152, %v2153
    %v2155 = vsel %vm433, %v2137, 0.0
    %v2156 = vadd.f32 %v2154, %v2155
    %v2157 = vsel %vm433, %v2140, 0.0
    %v2158 = vadd.f32 %v2156, %v2157
    %v2159 = vsel %vm433, %v2143, 0.0
    %v2160 = vadd.f32 %v2158, %v2159
    %v2161 = vsel %vm433, %v2146, 0.0
    %v2162 = vadd.f32 %v2160, %v2161
    %v2163 = vrot.slane %v2162, 4
    %v2164 = vadd.f32 %v2162, %v2163
    %v2165 = vrot.slane %v2164, 2
    %v2166 = vadd.f32 %v2164, %v2165
    %v2167 = vrot.slane %v2166, 1
    %v2168 = vadd.f32 %v2166, %v2167
    %v2169 = vmul.f32 %v2168, 0.015625
    %v2170 = vsub.f32 %v2125, %v2169
    %v2171 = vsub.f32 %v2128, %v2169
    %v2172 = vsub.f32 %v2131, %v2169
    %v2173 = vsub.f32 %v2134, %v2169
    %v2174 = vsub.f32 %v2137, %v2169
    %v2175 = vsub.f32 %v2140, %v2169
    %v2176 = vsub.f32 %v2143, %v2169
    %v2177 = vsub.f32 %v2146, %v2169
    %v2178 = vmul.f32 %v2170, %v2170
    %v2179 = vmul.f32 %v2171, %v2171
    %v2180 = vmul.f32 %v2172, %v2172
    %v2181 = vmul.f32 %v2173, %v2173
    %v2182 = vmul.f32 %v2174, %v2174
    %v2183 = vmul.f32 %v2175, %v2175
    %v2184 = vmul.f32 %v2176, %v2176
    %v2185 = vmul.f32 %v2177, %v2177
    %v2186 = vsel %vm433, %v2178, 0.0
    %v2187 = vsel %vm433, %v2179, 0.0
    %v2188 = vadd.f32 %v2186, %v2187
    %v2189 = vsel %vm433, %v2180, 0.0
    %v2190 = vadd.f32 %v2188, %v2189
    %v2191 = vsel %vm433, %v2181, 0.0
    %v2192 = vadd.f32 %v2190, %v2191
    %v2193 = vsel %vm433, %v2182, 0.0
    %v2194 = vadd.f32 %v2192, %v2193
    %v2195 = vsel %vm433, %v2183, 0.0
    %v2196 = vadd.f32 %v2194, %v2195
    %v2197 = vsel %vm433, %v2184, 0.0
    %v2198 = vadd.f32 %v2196, %v2197
    %v2199 = vsel %vm433, %v2185, 0.0
    %v2200 = vadd.f32 %v2198, %v2199
    %v2201 = vrot.slane %v2200, 4
    %v2202 = vadd.f32 %v2200, %v2201
    %v2203 = vrot.slane %v2202, 2
    %v2204 = vadd.f32 %v2202, %v2203
    %v2205 = vrot.slane %v2204, 1
    %v2206 = vadd.f32 %v2204, %v2205
    %v2207 = vmul.f32 %v2206, 0.015625
    %v2208 = vld [vmem:[%s11] sm:$0x1]
    %v2209 = vadd.f32 %v2207, 1e-05
    %v2210 = vrsqrt.pop %v2209
    %v2211 = vmul.f32 %v2210, %v2209
    %v2212 = vmul.f32 %v2211, %v2210
    %v2213 = vmul.f32 0.5, %v2212
    %v2214 = vsub.f32 1.5, %v2213
    %v2215 = vmul.f32 %v2210, %v2214
    %vm2216 = vweird.f32 %v2209
    %vm2217 = vweird.f32 %v2210
    %vm2218 = vmor %vm2216, %vm2217
    %v2219 = vsel %vm2218, %v2210, %v2215
    %v2220 = vmul.f32 %v2208, %v2219
    %v2222 = vperm.slane %v2220, 0
    %v2224 = vmul.f32 %v2170, %v2222
    %v2225 = vmul.f32 %v2171, %v2222
    %v2226 = vmul.f32 %v2172, %v2222
    %v2227 = vmul.f32 %v2173, %v2222
    %v2228 = vmul.f32 %v2174, %v2222
    %v2229 = vmul.f32 %v2175, %v2222
    %v2230 = vmul.f32 %v2176, %v2222
    %v2231 = vmul.f32 %v2177, %v2222
    %v2232 = vld [vmem:[%s12] sm:$0x1]
    %v2234 = vperm.slane %v2232, 0
    %v2236 = vadd.f32 %v2224, %v2234
    %v2237 = vadd.f32 %v2225, %v2234
    %v2238 = vadd.f32 %v2226, %v2234
    %v2239 = vadd.f32 %v2227, %v2234
    %v2240 = vadd.f32 %v2228, %v2234
    %v2241 = vadd.f32 %v2229, %v2234
    %v2242 = vadd.f32 %v2230, %v2234
    %v2243 = vadd.f32 %v2231, %v2234
    %v2244 = vmax.f32 %v2236, 0.0
    %v2245 = vmax.f32 %v2237, 0.0
    %v2246 = vmax.f32 %v2238, 0.0
    %v2247 = vmax.f32 %v2239, 0.0
    %v2248 = vmax.f32 %v2240, 0.0
    %v2249 = vmax.f32 %v2241, 0.0
    %v2250 = vmax.f32 %v2242, 0.0
    %v2251 = vmax.f32 %v2243, 0.0
    %v2252 = vld [vmem:[%s13] sm:$0xff]
    %v2253 = vld [vmem:[%s13 + $0x8] sm:$0xff]
    %v2254 = vld [vmem:[%s13 + $0x10] sm:$0xff]
    %v2255 = vld [vmem:[%s13 + $0x18] sm:$0xff]
    %v2256 = vmul.f32 %v2244, %v2252
    %v2257 = vmul.f32 %v2245, %v2253
    %v2258 = vmul.f32 %v2246, %v2254
    %v2259 = vmul.f32 %v2247, %v2255
    %v2260 = vmul.f32 %v2248, %v2252
    %v2261 = vmul.f32 %v2249, %v2253
    %v2262 = vmul.f32 %v2250, %v2254
    %v2263 = vmul.f32 %v2251, %v2255
    %v2264 = vsel %vm433, %v2256, 0.0
    %2265 = vadd.xlane.f32.xlu0 %v2264
    %v2266 = vpop.xlane.xlu0 %2265
    %v2267 = vsel %vm433, %v2257, 0.0
    %2268 = vadd.xlane.f32.xlu0 %v2267
    %v2269 = vpop.xlane.xlu0 %2268
    %v2270 = vsel %vm433, %v2258, 0.0
    %2271 = vadd.xlane.f32.xlu0 %v2270
    %v2272 = vpop.xlane.xlu0 %2271
    %v2273 = vsel %vm433, %v2259, 0.0
    %2274 = vadd.xlane.f32.xlu0 %v2273
    %v2275 = vpop.xlane.xlu0 %2274
    %v2276 = vsel %vm433, %v2260, 0.0
    %2277 = vadd.xlane.f32.xlu0 %v2276
    %v2278 = vpop.xlane.xlu0 %2277
    %v2279 = vsel %vm433, %v2261, 0.0
    %2280 = vadd.xlane.f32.xlu0 %v2279
    %v2281 = vpop.xlane.xlu0 %2280
    %v2282 = vsel %vm433, %v2262, 0.0
    %2283 = vadd.xlane.f32.xlu0 %v2282
    %v2284 = vpop.xlane.xlu0 %2283
    %v2285 = vsel %vm433, %v2263, 0.0
    %2286 = vadd.xlane.f32.xlu0 %v2285
    %v2287 = vpop.xlane.xlu0 %2286
    %v2296 = vlaneseq
    %v2297 = vand.u32 %v2296, 127
    %v2298 = vperm.slane %v2266, %v2297
    %v2299 = vadd.s32 %v2297, 4294967288
    %v2300 = vperm.slane %v2269, %v2299
    %vm2301 = vcmask 130112
    %v2302 = vsel %vm2301, %v2300, %v2298
    %v2303 = vadd.s32 %v2297, 4294967280
    %v2304 = vperm.slane %v2272, %v2303
    %vm2305 = vcmask 195712
    %v2306 = vsel %vm2305, %v2304, %v2302
    %v2307 = vadd.s32 %v2297, 4294967272
    %v2308 = vperm.slane %v2275, %v2307
    %vm2309 = vcmask 261312
    %v2310 = vsel %vm2309, %v2308, %v2306
    %v2311 = vperm.slane %v2278, %v2297
    %v2312 = vperm.slane %v2281, %v2299
    %v2313 = vsel %vm2301, %v2312, %v2311
    %v2314 = vperm.slane %v2284, %v2303
    %v2315 = vsel %vm2305, %v2314, %v2313
    %v2316 = vperm.slane %v2287, %v2307
    %v2317 = vsel %vm2309, %v2316, %v2315
    %vm2318 = vcmask 1041409
    %v2319 = vsel %vm2318, %v2317, %v2310
    %vm2321 = vcmask 254976
    %v2322 = vsel %vm2321, %v2319, 0.0
    %2323 = vadd.xlane.f32.xlu0 %v2322
    %v2324 = vpop.xlane.xlu0 %2323
    %s2325 = sld [smem:[#allocation5]]
    %v2326 = vstv %s2325
    %v2327 = vadd.f32 %v2324, %v2326
    %vm2328 = vcmask 1024
    %2329 = vst.msk [vmem:[%s15] sm:$0x3] %vm2328, %v2327
    // Predicated region
    $region66: #{psnet_forward.1} parent=1 // pred_check
      _
    $region67: #{psnet_forward.1} parent=1 // pred_check_branch
      %2331 = sbr.rel (0) target = $region69
    $region68: #{psnet_forward.1} parent=1 // pred_region
      _
    $region69: #{psnet_forward.1} parent=1 // pred_fallthru
      _
    // Predicated region
    $region70: #{psnet_forward.1} parent=1 // pred_check
      _
    $region71: #{psnet_forward.1} parent=1 // pred_check_branch
      %2333 = sbr.rel (0) target = $region73
    $region72: #{psnet_forward.1} parent=1 // pred_region
      _
    $region73: #{psnet_forward.1} parent=1 // pred_fallthru
      _
    %2334 = vsyncpa [#allocation7], 1

</llo_original>
